<compile_context>
chip_gen: v7x
topology: tpu7x:2x2x1
jax: 0.10.0
libtpu: 0.0.40
codegen_flags: <defaults>
</compile_context>

<pallas_src>
import functools

import jax
import jax.numpy as jnp
from jax.experimental import pallas as pl
from jax.experimental.pallas import tpu as pltpu

_LPAD = 8          # sublane-aligned start column of the interior in the scratch
_LANE = 128        # channel padding target (lane width)


def _round_up(n, m):
    return (n + m - 1) // m * m


def _inverted_residual_kernel(x_ref, w1_ref, b1_ref, wd_ref, b2_ref,
                              w3_ref, b3_ref, o_ref, pad_ref,
                              *, stride, use_res_connect):
    # One grid step == one batch element; everything lives in VMEM.
    _, H, W, Cp = x_ref.shape
    Chp = w1_ref.shape[1]
    Cop = w3_ref.shape[1]
    _, Ho, Wo, _ = o_ref.shape
    c0 = _LPAD - 1                      # left-halo column in the scratch
    wpad = pad_ref.shape[1]             # scratch width (= _LPAD + W + 1)

    # ---- 1x1 expand conv (BN scale folded into w1) + bias + ReLU6 ----
    # MXU gets full 128x128 bf16 operands; accumulation in f32.
    h1 = jnp.dot(x_ref[0].reshape(H * W, Cp).astype(jnp.bfloat16),
                 w1_ref[...], preferred_element_type=jnp.float32)   # (H*W, Chp)
    h1 = jnp.clip(h1 + b1_ref[...], 0.0, 6.0)

    # ---- stage h1 into the padded depthwise scratch ----
    # Interior store starts at sublane offset _LPAD (aligned -> unmasked vst);
    # only the 1-pixel halo strips are zeroed (every step, megacore-safe).
    pad_ref[1:H + 1, _LPAD:_LPAD + W, :] = h1.reshape(H, W, Chp)
    pad_ref[0:1, :, :] = jnp.zeros((1, wpad, Chp), jnp.float32)
    pad_ref[H + 1:H + 2, :, :] = jnp.zeros((1, wpad, Chp), jnp.float32)
    pad_ref[1:H + 1, c0:c0 + 1, :] = jnp.zeros((H, 1, Chp), jnp.float32)
    pad_ref[1:H + 1, _LPAD + W:_LPAD + W + 1, :] = jnp.zeros((H, 1, Chp),
                                                             jnp.float32)

    # ---- 3x3 depthwise conv (BN scale folded into wd) + bias + ReLU6 ----
    # Kept in f32 on the VPU (v5e has no bf16 VPU).
    rspan = stride * (Ho - 1) + 1
    cspan = stride * (Wo - 1) + 1
    wd = wd_ref[...]                                       # (3, 3, Chp)
    acc = jnp.zeros((Ho, Wo, Chp), jnp.float32)
    for kh in range(3):
        for kw in range(3):
            win = pad_ref[kh:kh + rspan, c0 + kw:c0 + kw + cspan, :]
            if stride > 1:
                # TODO(synk): for stride=2, compact even/odd columns once into
                # a scratch instead of strided value slices per tap.
                win = win[::stride, ::stride, :]
            acc = acc + win * wd[kh, kw]
    h2 = jnp.clip(acc + b2_ref[...], 0.0, 6.0)             # (Ho, Wo, Chp)

    # ---- 1x1 project conv (BN scale folded into w3) + bias ----
    h3 = jnp.dot(h2.reshape(Ho * Wo, Chp).astype(jnp.bfloat16),
                 w3_ref[...], preferred_element_type=jnp.float32)   # (Ho*Wo, Cop)
    h3 = (h3 + b3_ref[...]).reshape(Ho, Wo, Cop)

    if use_res_connect:
        h3 = h3 + x_ref[0]                                 # stride==1, Cp==Cop

    o_ref[0] = h3.astype(o_ref.dtype)


def inverted_residual(x_nhwc, padded_params, *, stride, use_res_connect, oup):
    """x_nhwc: (N, H, W, C) float32. Returns (N, Ho, Wo, oup) float32."""
    w1, b1, wd, b2, w3, b3 = padded_params
    N, H, W, C = x_nhwc.shape
    Cp, Chp = w1.shape
    Cop = w3.shape[1]
    Ho = (H + 2 - 3) // stride + 1
    Wo = (W + 2 - 3) // stride + 1

    # Lane-dense input: pad channels to the full 128-lane width.
    xp = jnp.pad(x_nhwc, ((0, 0), (0, 0), (0, 0), (0, Cp - C)))

    kernel = functools.partial(_inverted_residual_kernel,
                               stride=stride, use_res_connect=use_res_connect)

    full = lambda a: pl.BlockSpec(a.shape, lambda b: (0,) * a.ndim)

    out = pl.pallas_call(
        kernel,
        out_shape=jax.ShapeDtypeStruct((N, Ho, Wo, Cop), jnp.float32),
        grid=(N,),
        in_specs=[
            pl.BlockSpec((1, H, W, Cp), lambda b: (b, 0, 0, 0)),
            full(w1), full(b1), full(wd), full(b2), full(w3), full(b3),
        ],
        out_specs=pl.BlockSpec((1, Ho, Wo, Cop), lambda b: (b, 0, 0, 0)),
        scratch_shapes=[pltpu.VMEM((H + 2, _LPAD + W + 1, Chp), jnp.float32)],
        compiler_params=pltpu.CompilerParams(
            dimension_semantics=("parallel",),      # N=2 keeps both v7x TCs busy
            vmem_limit_bytes=32 * 1024 * 1024),
    )(xp, w1, b1, wd, b2, w3, b3)

    return out[..., :oup]          # drop the zero-padded channels (lane padding)


def _make_raw_params(key, inp, oup, expand_ratio):
    """PyTorch-module-equivalent raw params (conv weights + eval-mode BN)."""
    Ch = inp * expand_ratio
    ks = jax.random.split(key, 16)
    eps = 1e-5

    def bn(kg, kb, km, kv, c):
        gamma = jax.random.uniform(kg, (c,), jnp.float32, 0.5, 1.5)
        beta = jax.random.normal(kb, (c,), jnp.float32) * 0.1
        mean = jax.random.normal(km, (c,), jnp.float32) * 0.1
        var = jax.random.uniform(kv, (c,), jnp.float32, 0.5, 1.5)
        scale = gamma / jnp.sqrt(var + eps)
        bias = beta - mean * scale
        return scale, bias

    w1 = jax.random.normal(ks[0], (inp, Ch), jnp.float32) * 0.1     # 1x1 expand
    wd = jax.random.normal(ks[1], (3, 3, Ch), jnp.float32) * 0.1    # 3x3 depthwise
    w3 = jax.random.normal(ks[2], (Ch, oup), jnp.float32) * 0.1     # 1x1 project
    s1, b1 = bn(ks[3], ks[4], ks[5], ks[6], Ch)
    s2, b2 = bn(ks[7], ks[8], ks[9], ks[10], Ch)
    s3, b3 = bn(ks[11], ks[12], ks[13], ks[14], oup)
    return (w1, s1, b1, wd, s2, b2, w3, s3, b3)


def fold_and_pad_params(raw, lane=_LANE):
    """Fold eval-mode BN scale into the conv weights, pad channels to `lane`,
    and cast the 1x1 conv weights to bf16 for the MXU."""
    w1, s1, b1, wd, s2, b2, w3, s3, b3 = raw
    inp, Ch = w1.shape
    oup = w3.shape[1]
    Cp, Chp, Cop = _round_up(inp, lane), _round_up(Ch, lane), _round_up(oup, lane)

    w1f = w1 * s1[None, :]                 # scale per output channel
    wdf = wd * s2[None, None, :]
    w3f = w3 * s3[None, :]

    pad2 = lambda a, r, c: jnp.pad(a, ((0, r - a.shape[0]), (0, c - a.shape[1])))
    w1p = pad2(w1f, Cp, Chp).astype(jnp.bfloat16)
    w3p = pad2(w3f, Chp, Cop).astype(jnp.bfloat16)
    wdp = jnp.pad(wdf, ((0, 0), (0, 0), (0, Chp - Ch)))            # f32
    b1p = jnp.pad(b1, (0, Chp - Ch)).reshape(1, Chp)
    b2p = jnp.pad(b2, (0, Chp - Ch)).reshape(1, Chp)
    b3p = jnp.pad(b3, (0, Cop - oup)).reshape(1, Cop)
    return (w1p, b1p, wdp, b2p, w3p, b3p)


def _reference(x_nhwc, padded_params, *, stride, use_res_connect, oup):
    """Pure-JAX NHWC reference mirroring the kernel's precision choices
    (bf16 matmul operands, f32 accumulation, f32 elementwise)."""
    w1, b1, wd, b2, w3, b3 = padded_params
    N, H, W, C = x_nhwc.shape
    Cp = w1.shape[0]
    xp = jnp.pad(x_nhwc, ((0, 0), (0, 0), (0, 0), (0, Cp - C)))
    Ho = (H + 2 - 3) // stride + 1
    Wo = (W + 2 - 3) // stride + 1

    h1 = jnp.einsum('nhwc,cd->nhwd', xp.astype(jnp.bfloat16), w1,
                    preferred_element_type=jnp.float32) + b1
    h1 = jnp.clip(h1, 0.0, 6.0)
    hp = jnp.pad(h1, ((0, 0), (1, 1), (1, 1), (0, 0)))
    acc = jnp.zeros((N, Ho, Wo, h1.shape[-1]), jnp.float32)
    for kh in range(3):
        for kw in range(3):
            acc = acc + hp[:, kh:kh + stride * (Ho - 1) + 1:stride,
                           kw:kw + stride * (Wo - 1) + 1:stride, :] * wd[kh, kw]
    h2 = jnp.clip(acc + b2, 0.0, 6.0)
    h3 = jnp.einsum('nhwc,cd->nhwd', h2.astype(jnp.bfloat16), w3,
                    preferred_element_type=jnp.float32) + b3
    if use_res_connect:
        h3 = h3 + xp
    return h3[..., :oup]


if __name__ == "__main__":
    # Module config: inp=4, oup=4, stride=1, expand_ratio=6 -> residual is used.
    inp, oup, stride, expand_ratio = 4, 4, 1, 6
    use_res_connect = (stride == 1 and inp == oup)

    key = jax.random.PRNGKey(0)
    kx, kp = jax.random.split(key)
    x_nchw = jax.random.normal(kx, (2, inp, 16, 16), jnp.float32)   # PyTorch NCHW
    raw_params = _make_raw_params(kp, inp, oup, expand_ratio)
    params = fold_and_pad_params(raw_params)

    x_nhwc = jnp.transpose(x_nchw, (0, 2, 3, 1))                    # NCHW -> NHWC

    out = inverted_residual(x_nhwc, params, stride=stride,
                            use_res_connect=use_res_connect, oup=oup)
    out = jax.block_until_ready(out)

    ref = _reference(x_nhwc, params, stride=stride,
                     use_res_connect=use_res_connect, oup=oup)
    assert out.shape == ref.shape
    max_err = float(jnp.max(jnp.abs(out - ref)))
    assert jnp.allclose(out, ref, atol=2e-3, rtol=2e-3), \
        f"mismatch vs reference (max abs err {max_err})"

    # Back to NCHW to match PyTorch output convention (not strictly needed).
    _ = jnp.transpose(out, (0, 3, 1, 2))

    print("KERNEL_OK")
</pallas_src>

<mosaic_0001>
module attributes {stable_mosaic.version = 11 : i64} {
  func.func @_inverted_residual_kernel(%arg0: i32, %arg1: memref<1x16x16x128xf32, #tpu.memory_space<vmem>>, %arg2: memref<128x128xbf16, #tpu.memory_space<vmem>>, %arg3: memref<1x128xf32, #tpu.memory_space<vmem>>, %arg4: memref<3x3x128xf32, #tpu.memory_space<vmem>>, %arg5: memref<1x128xf32, #tpu.memory_space<vmem>>, %arg6: memref<128x128xbf16, #tpu.memory_space<vmem>>, %arg7: memref<1x128xf32, #tpu.memory_space<vmem>>, %arg8: memref<1x16x16x128xf32, #tpu.memory_space<vmem>>, %arg9: memref<18x25x128xf32, #tpu.memory_space<vmem>>) attributes {dimension_semantics = [#tpu.dimension_semantics<parallel>], iteration_bounds = array<i64: 2>, scalar_prefetch = 0 : i64, scratch_operands = 1 : i64, tpu.core_type = #tpu.core_type<tc>, window_params = [{transform_indices = @transform_0, window_bounds = array<i64: 1, 16, 16, 128>}, {pipeline_mode = #tpu.pipeline_mode<synchronous>, transform_indices = @transform_1, window_bounds = array<i64: 128, 128>}, {pipeline_mode = #tpu.pipeline_mode<synchronous>, transform_indices = @transform_2, window_bounds = array<i64: 1, 128>}, {pipeline_mode = #tpu.pipeline_mode<synchronous>, transform_indices = @transform_3, window_bounds = array<i64: 3, 3, 128>}, {pipeline_mode = #tpu.pipeline_mode<synchronous>, transform_indices = @transform_4, window_bounds = array<i64: 1, 128>}, {pipeline_mode = #tpu.pipeline_mode<synchronous>, transform_indices = @transform_5, window_bounds = array<i64: 128, 128>}, {pipeline_mode = #tpu.pipeline_mode<synchronous>, transform_indices = @transform_6, window_bounds = array<i64: 1, 128>}, {transform_indices = @transform_7, window_bounds = array<i64: 1, 16, 16, 128>}]} {
    %c0 = arith.constant 0 : index
    %c0_0 = arith.constant 0 : index
    %c0_1 = arith.constant 0 : index
    %c0_2 = arith.constant 0 : index
    %0 = vector.load %arg1[%c0, %c0_0, %c0_1, %c0_2] : memref<1x16x16x128xf32, #tpu.memory_space<vmem>>, vector<1x16x16x128xf32>
    %1 = vector.shape_cast %0 : vector<1x16x16x128xf32> to vector<16x16x128xf32>
    %2 = vector.shape_cast %1 : vector<16x16x128xf32> to vector<256x128xf32>
    %3 = arith.truncf %2 : vector<256x128xf32> to vector<256x128xbf16>
    %c0_3 = arith.constant 0 : index
    %c0_4 = arith.constant 0 : index
    %4 = vector.load %arg2[%c0_3, %c0_4] : memref<128x128xbf16, #tpu.memory_space<vmem>>, vector<128x128xbf16>
    %cst = arith.constant dense<0.000000e+00> : vector<256x128xf32>
    %5 = tpu.matmul %3, %4, %cst {dimension_numbers = #tpu.dot_dimension_numbers<[1], [0], [0], [1], [0, 0, 1, 1], [], []>} : vector<256x128xbf16>, vector<128x128xbf16>, vector<256x128xf32> -> vector<256x128xf32>
    %c0_5 = arith.constant 0 : index
    %c0_6 = arith.constant 0 : index
    %6 = vector.load %arg3[%c0_5, %c0_6] : memref<1x128xf32, #tpu.memory_space<vmem>>, vector<1x128xf32>
    %7 = vector.broadcast %6 : vector<1x128xf32> to vector<256x128xf32>
    %8 = arith.addf %5, %7 : vector<256x128xf32>
    %cst_7 = arith.constant 0.000000e+00 : f32
    %cst_8 = arith.constant 6.000000e+00 : f32
    %9 = vector.broadcast %cst_7 : f32 to vector<256x128xf32>
    %10 = arith.maximumf %9, %8 : vector<256x128xf32>
    %11 = vector.broadcast %cst_8 : f32 to vector<256x128xf32>
    %12 = arith.minimumf %11, %10 : vector<256x128xf32>
    %13 = vector.shape_cast %12 : vector<256x128xf32> to vector<16x16x128xf32>
    %c1 = arith.constant 1 : index
    %c8 = arith.constant 8 : index
    %c0_9 = arith.constant 0 : index
    %14 = vector.load %arg9[%c1, %c8, %c0_9] : memref<18x25x128xf32, #tpu.memory_space<vmem>>, vector<16x16x128xf32>
    tpu.vector_store %arg9[%c1, %c8, %c0_9], %13 {strides = array<i32>} : memref<18x25x128xf32, #tpu.memory_space<vmem>>, vector<16x16x128xf32>,
    %cst_10 = arith.constant 0.000000e+00 : f32
    %15 = vector.broadcast %cst_10 : f32 to vector<1x25x128xf32>
    %c0_11 = arith.constant 0 : index
    %c0_12 = arith.constant 0 : index
    %c0_13 = arith.constant 0 : index
    %16 = vector.load %arg9[%c0_11, %c0_12, %c0_13] : memref<18x25x128xf32, #tpu.memory_space<vmem>>, vector<1x25x128xf32>
    tpu.vector_store %arg9[%c0_11, %c0_12, %c0_13], %15 {strides = array<i32>} : memref<18x25x128xf32, #tpu.memory_space<vmem>>, vector<1x25x128xf32>,
    %cst_14 = arith.constant 0.000000e+00 : f32
    %17 = vector.broadcast %cst_14 : f32 to vector<1x25x128xf32>
    %c17 = arith.constant 17 : index
    %c0_15 = arith.constant 0 : index
    %c0_16 = arith.constant 0 : index
    %18 = vector.load %arg9[%c17, %c0_15, %c0_16] : memref<18x25x128xf32, #tpu.memory_space<vmem>>, vector<1x25x128xf32>
    tpu.vector_store %arg9[%c17, %c0_15, %c0_16], %17 {strides = array<i32>} : memref<18x25x128xf32, #tpu.memory_space<vmem>>, vector<1x25x128xf32>,
    %cst_17 = arith.constant 0.000000e+00 : f32
    %19 = vector.broadcast %cst_17 : f32 to vector<16x1x128xf32>
    %c1_18 = arith.constant 1 : index
    %c7 = arith.constant 7 : index
    %c0_19 = arith.constant 0 : index
    %20 = vector.load %arg9[%c1_18, %c7, %c0_19] : memref<18x25x128xf32, #tpu.memory_space<vmem>>, vector<16x1x128xf32>
    tpu.vector_store %arg9[%c1_18, %c7, %c0_19], %19 {strides = array<i32>} : memref<18x25x128xf32, #tpu.memory_space<vmem>>, vector<16x1x128xf32>,
    %cst_20 = arith.constant 0.000000e+00 : f32
    %21 = vector.broadcast %cst_20 : f32 to vector<16x1x128xf32>
    %c1_21 = arith.constant 1 : index
    %c24 = arith.constant 24 : index
    %c0_22 = arith.constant 0 : index
    %22 = vector.load %arg9[%c1_21, %c24, %c0_22] : memref<18x25x128xf32, #tpu.memory_space<vmem>>, vector<16x1x128xf32>
    tpu.vector_store %arg9[%c1_21, %c24, %c0_22], %21 {strides = array<i32>} : memref<18x25x128xf32, #tpu.memory_space<vmem>>, vector<16x1x128xf32>,
    %c0_23 = arith.constant 0 : index
    %c0_24 = arith.constant 0 : index
    %c0_25 = arith.constant 0 : index
    %23 = vector.load %arg4[%c0_23, %c0_24, %c0_25] : memref<3x3x128xf32, #tpu.memory_space<vmem>>, vector<3x3x128xf32>
    %cst_26 = arith.constant 0.000000e+00 : f32
    %24 = vector.broadcast %cst_26 : f32 to vector<16x16x128xf32>
    %c0_27 = arith.constant 0 : index
    %c7_28 = arith.constant 7 : index
    %c0_29 = arith.constant 0 : index
    %25 = vector.load %arg9[%c0_27, %c7_28, %c0_29] : memref<18x25x128xf32, #tpu.memory_space<vmem>>, vector<16x16x128xf32>
    %26 = vector.extract_strided_slice %23 {offsets = [0, 0, 0], sizes = [1, 1, 128], strides = [1, 1, 1]} : vector<3x3x128xf32> to vector<1x1x128xf32>
    %27 = vector.shape_cast %26 : vector<1x1x128xf32> to vector<128xf32>
    %28 = vector.shape_cast %27 : vector<128xf32> to vector<1x1x128xf32>
    %29 = vector.broadcast %28 : vector<1x1x128xf32> to vector<16x16x128xf32>
    %30 = arith.mulf %25, %29 : vector<16x16x128xf32>
    %31 = arith.addf %24, %30 : vector<16x16x128xf32>
    %c0_30 = arith.constant 0 : index
    %c8_31 = arith.constant 8 : index
    %c0_32 = arith.constant 0 : index
    %32 = vector.load %arg9[%c0_30, %c8_31, %c0_32] : memref<18x25x128xf32, #tpu.memory_space<vmem>>, vector<16x16x128xf32>
    %33 = vector.extract_strided_slice %23 {offsets = [0, 1, 0], sizes = [1, 1, 128], strides = [1, 1, 1]} : vector<3x3x128xf32> to vector<1x1x128xf32>
    %34 = vector.shape_cast %33 : vector<1x1x128xf32> to vector<128xf32>
    %35 = vector.shape_cast %34 : vector<128xf32> to vector<1x1x128xf32>
    %36 = vector.broadcast %35 : vector<1x1x128xf32> to vector<16x16x128xf32>
    %37 = arith.mulf %32, %36 : vector<16x16x128xf32>
    %38 = arith.addf %31, %37 : vector<16x16x128xf32>
    %c0_33 = arith.constant 0 : index
    %c9 = arith.constant 9 : index
    %c0_34 = arith.constant 0 : index
    %39 = vector.load %arg9[%c0_33, %c9, %c0_34] : memref<18x25x128xf32, #tpu.memory_space<vmem>>, vector<16x16x128xf32>
    %40 = vector.extract_strided_slice %23 {offsets = [0, 2, 0], sizes = [1, 1, 128], strides = [1, 1, 1]} : vector<3x3x128xf32> to vector<1x1x128xf32>
    %41 = vector.shape_cast %40 : vector<1x1x128xf32> to vector<128xf32>
    %42 = vector.shape_cast %41 : vector<128xf32> to vector<1x1x128xf32>
    %43 = vector.broadcast %42 : vector<1x1x128xf32> to vector<16x16x128xf32>
    %44 = arith.mulf %39, %43 : vector<16x16x128xf32>
    %45 = arith.addf %38, %44 : vector<16x16x128xf32>
    %c1_35 = arith.constant 1 : index
    %c7_36 = arith.constant 7 : index
    %c0_37 = arith.constant 0 : index
    %46 = vector.load %arg9[%c1_35, %c7_36, %c0_37] : memref<18x25x128xf32, #tpu.memory_space<vmem>>, vector<16x16x128xf32>
    %47 = vector.extract_strided_slice %23 {offsets = [1, 0, 0], sizes = [1, 1, 128], strides = [1, 1, 1]} : vector<3x3x128xf32> to vector<1x1x128xf32>
    %48 = vector.shape_cast %47 : vector<1x1x128xf32> to vector<128xf32>
    %49 = vector.shape_cast %48 : vector<128xf32> to vector<1x1x128xf32>
    %50 = vector.broadcast %49 : vector<1x1x128xf32> to vector<16x16x128xf32>
    %51 = arith.mulf %46, %50 : vector<16x16x128xf32>
    %52 = arith.addf %45, %51 : vector<16x16x128xf32>
    %c1_38 = arith.constant 1 : index
    %c8_39 = arith.constant 8 : index
    %c0_40 = arith.constant 0 : index
    %53 = vector.load %arg9[%c1_38, %c8_39, %c0_40] : memref<18x25x128xf32, #tpu.memory_space<vmem>>, vector<16x16x128xf32>
    %54 = vector.extract_strided_slice %23 {offsets = [1, 1, 0], sizes = [1, 1, 128], strides = [1, 1, 1]} : vector<3x3x128xf32> to vector<1x1x128xf32>
    %55 = vector.shape_cast %54 : vector<1x1x128xf32> to vector<128xf32>
    %56 = vector.shape_cast %55 : vector<128xf32> to vector<1x1x128xf32>
    %57 = vector.broadcast %56 : vector<1x1x128xf32> to vector<16x16x128xf32>
    %58 = arith.mulf %53, %57 : vector<16x16x128xf32>
    %59 = arith.addf %52, %58 : vector<16x16x128xf32>
    %c1_41 = arith.constant 1 : index
    %c9_42 = arith.constant 9 : index
    %c0_43 = arith.constant 0 : index
    %60 = vector.load %arg9[%c1_41, %c9_42, %c0_43] : memref<18x25x128xf32, #tpu.memory_space<vmem>>, vector<16x16x128xf32>
    %61 = vector.extract_strided_slice %23 {offsets = [1, 2, 0], sizes = [1, 1, 128], strides = [1, 1, 1]} : vector<3x3x128xf32> to vector<1x1x128xf32>
    %62 = vector.shape_cast %61 : vector<1x1x128xf32> to vector<128xf32>
    %63 = vector.shape_cast %62 : vector<128xf32> to vector<1x1x128xf32>
    %64 = vector.broadcast %63 : vector<1x1x128xf32> to vector<16x16x128xf32>
    %65 = arith.mulf %60, %64 : vector<16x16x128xf32>
    %66 = arith.addf %59, %65 : vector<16x16x128xf32>
    %c2 = arith.constant 2 : index
    %c7_44 = arith.constant 7 : index
    %c0_45 = arith.constant 0 : index
    %67 = vector.load %arg9[%c2, %c7_44, %c0_45] : memref<18x25x128xf32, #tpu.memory_space<vmem>>, vector<16x16x128xf32>
    %68 = vector.extract_strided_slice %23 {offsets = [2, 0, 0], sizes = [1, 1, 128], strides = [1, 1, 1]} : vector<3x3x128xf32> to vector<1x1x128xf32>
    %69 = vector.shape_cast %68 : vector<1x1x128xf32> to vector<128xf32>
    %70 = vector.shape_cast %69 : vector<128xf32> to vector<1x1x128xf32>
    %71 = vector.broadcast %70 : vector<1x1x128xf32> to vector<16x16x128xf32>
    %72 = arith.mulf %67, %71 : vector<16x16x128xf32>
    %73 = arith.addf %66, %72 : vector<16x16x128xf32>
    %c2_46 = arith.constant 2 : index
    %c8_47 = arith.constant 8 : index
    %c0_48 = arith.constant 0 : index
    %74 = vector.load %arg9[%c2_46, %c8_47, %c0_48] : memref<18x25x128xf32, #tpu.memory_space<vmem>>, vector<16x16x128xf32>
    %75 = vector.extract_strided_slice %23 {offsets = [2, 1, 0], sizes = [1, 1, 128], strides = [1, 1, 1]} : vector<3x3x128xf32> to vector<1x1x128xf32>
    %76 = vector.shape_cast %75 : vector<1x1x128xf32> to vector<128xf32>
    %77 = vector.shape_cast %76 : vector<128xf32> to vector<1x1x128xf32>
    %78 = vector.broadcast %77 : vector<1x1x128xf32> to vector<16x16x128xf32>
    %79 = arith.mulf %74, %78 : vector<16x16x128xf32>
    %80 = arith.addf %73, %79 : vector<16x16x128xf32>
    %c2_49 = arith.constant 2 : index
    %c9_50 = arith.constant 9 : index
    %c0_51 = arith.constant 0 : index
    %81 = vector.load %arg9[%c2_49, %c9_50, %c0_51] : memref<18x25x128xf32, #tpu.memory_space<vmem>>, vector<16x16x128xf32>
    %82 = vector.extract_strided_slice %23 {offsets = [2, 2, 0], sizes = [1, 1, 128], strides = [1, 1, 1]} : vector<3x3x128xf32> to vector<1x1x128xf32>
    %83 = vector.shape_cast %82 : vector<1x1x128xf32> to vector<128xf32>
    %84 = vector.shape_cast %83 : vector<128xf32> to vector<1x1x128xf32>
    %85 = vector.broadcast %84 : vector<1x1x128xf32> to vector<16x16x128xf32>
    %86 = arith.mulf %81, %85 : vector<16x16x128xf32>
    %87 = arith.addf %80, %86 : vector<16x16x128xf32>
    %c0_52 = arith.constant 0 : index
    %c0_53 = arith.constant 0 : index
    %88 = vector.load %arg5[%c0_52, %c0_53] : memref<1x128xf32, #tpu.memory_space<vmem>>, vector<1x128xf32>
    %89 = vector.shape_cast %88 : vector<1x128xf32> to vector<1x1x128xf32>
    %90 = vector.broadcast %89 : vector<1x1x128xf32> to vector<16x16x128xf32>
    %91 = arith.addf %87, %90 : vector<16x16x128xf32>
    %cst_54 = arith.constant 0.000000e+00 : f32
    %cst_55 = arith.constant 6.000000e+00 : f32
    %92 = vector.broadcast %cst_54 : f32 to vector<16x16x128xf32>
    %93 = arith.maximumf %92, %91 : vector<16x16x128xf32>
    %94 = vector.broadcast %cst_55 : f32 to vector<16x16x128xf32>
    %95 = arith.minimumf %94, %93 : vector<16x16x128xf32>
    %96 = vector.shape_cast %95 : vector<16x16x128xf32> to vector<256x128xf32>
    %97 = arith.truncf %96 : vector<256x128xf32> to vector<256x128xbf16>
    %c0_56 = arith.constant 0 : index
    %c0_57 = arith.constant 0 : index
    %98 = vector.load %arg6[%c0_56, %c0_57] : memref<128x128xbf16, #tpu.memory_space<vmem>>, vector<128x128xbf16>
    %cst_58 = arith.constant dense<0.000000e+00> : vector<256x128xf32>
    %99 = tpu.matmul %97, %98, %cst_58 {dimension_numbers = #tpu.dot_dimension_numbers<[1], [0], [0], [1], [0, 0, 1, 1], [], []>} : vector<256x128xbf16>, vector<128x128xbf16>, vector<256x128xf32> -> vector<256x128xf32>
    %c0_59 = arith.constant 0 : index
    %c0_60 = arith.constant 0 : index
    %100 = vector.load %arg7[%c0_59, %c0_60] : memref<1x128xf32, #tpu.memory_space<vmem>>, vector<1x128xf32>
    %101 = vector.broadcast %100 : vector<1x128xf32> to vector<256x128xf32>
    %102 = arith.addf %99, %101 : vector<256x128xf32>
    %103 = vector.shape_cast %102 : vector<256x128xf32> to vector<16x16x128xf32>
    %c0_61 = arith.constant 0 : index
    %c0_62 = arith.constant 0 : index
    %c0_63 = arith.constant 0 : index
    %c0_64 = arith.constant 0 : index
    %104 = vector.load %arg1[%c0_61, %c0_62, %c0_63, %c0_64] : memref<1x16x16x128xf32, #tpu.memory_space<vmem>>, vector<1x16x16x128xf32>
    %105 = vector.shape_cast %104 : vector<1x16x16x128xf32> to vector<16x16x128xf32>
    %106 = arith.addf %103, %105 : vector<16x16x128xf32>
    %c0_65 = arith.constant 0 : index
    %c0_66 = arith.constant 0 : index
    %c0_67 = arith.constant 0 : index
    %c0_68 = arith.constant 0 : index
    %107 = vector.load %arg8[%c0_65, %c0_66, %c0_67, %c0_68] : memref<1x16x16x128xf32, #tpu.memory_space<vmem>>, vector<1x16x16x128xf32>
    %108 = vector.shape_cast %107 : vector<1x16x16x128xf32> to vector<16x16x128xf32>
    %109 = vector.shape_cast %106 : vector<16x16x128xf32> to vector<1x16x16x128xf32>
    tpu.vector_store %arg8[%c0_65, %c0_66, %c0_67, %c0_68], %109 {strides = array<i32>} : memref<1x16x16x128xf32, #tpu.memory_space<vmem>>, vector<1x16x16x128xf32>,
    return
  }
  func.func @transform_0(%arg0: i32) -> (i32, i32, i32, i32) {
    %c0_i32 = arith.constant 0 : i32
    %c0_i32_0 = arith.constant 0 : i32
    %c0_i32_1 = arith.constant 0 : i32
    %c0_i32_2 = arith.constant 0 : i32
    return %arg0, %c0_i32, %c0_i32_0, %c0_i32_1 : i32, i32, i32, i32
  }
  func.func @transform_1(%arg0: i32) -> (i32, i32) {
    %c0_i32 = arith.constant 0 : i32
    %c0_i32_0 = arith.constant 0 : i32
    %c0_i32_1 = arith.constant 0 : i32
    return %c0_i32, %c0_i32_0 : i32, i32
  }
  func.func @transform_2(%arg0: i32) -> (i32, i32) {
    %c0_i32 = arith.constant 0 : i32
    %c0_i32_0 = arith.constant 0 : i32
    %c0_i32_1 = arith.constant 0 : i32
    return %c0_i32, %c0_i32_0 : i32, i32
  }
  func.func @transform_3(%arg0: i32) -> (i32, i32, i32) {
    %c0_i32 = arith.constant 0 : i32
    %c0_i32_0 = arith.constant 0 : i32
    %c0_i32_1 = arith.constant 0 : i32
    %c0_i32_2 = arith.constant 0 : i32
    return %c0_i32, %c0_i32_0, %c0_i32_1 : i32, i32, i32
  }
  func.func @transform_4(%arg0: i32) -> (i32, i32) {
    %c0_i32 = arith.constant 0 : i32
    %c0_i32_0 = arith.constant 0 : i32
    %c0_i32_1 = arith.constant 0 : i32
    return %c0_i32, %c0_i32_0 : i32, i32
  }
  func.func @transform_5(%arg0: i32) -> (i32, i32) {
    %c0_i32 = arith.constant 0 : i32
    %c0_i32_0 = arith.constant 0 : i32
    %c0_i32_1 = arith.constant 0 : i32
    return %c0_i32, %c0_i32_0 : i32, i32
  }
  func.func @transform_6(%arg0: i32) -> (i32, i32) {
    %c0_i32 = arith.constant 0 : i32
    %c0_i32_0 = arith.constant 0 : i32
    %c0_i32_1 = arith.constant 0 : i32
    return %c0_i32, %c0_i32_0 : i32, i32
  }
  func.func @transform_7(%arg0: i32) -> (i32, i32, i32, i32) {
    %c0_i32 = arith.constant 0 : i32
    %c0_i32_0 = arith.constant 0 : i32
    %c0_i32_1 = arith.constant 0 : i32
    %c0_i32_2 = arith.constant 0 : i32
    return %arg0, %c0_i32, %c0_i32_0, %c0_i32_1 : i32, i32, i32, i32
  }
}

</mosaic_0001>

<llo_original>
// kernel: tpu_custom_call.1
$region0: #{tpu_custom_call.1}
  #allocation0 [shape = 'u32[]', space=smem, size = 0x4, offset = 0x4, fixed_abs, tag = 'smem constant byte address 0x4 - core index']
  #allocation1 [shape = 'u32[144,128]{1,0:T(1,128)}', space=vmem, size = 0x12000, scoped, tag = 'internal scratch']
  #allocation2 [shape = 'f32[18,25,128]{2,1,0:T(8,128)}', space=vmem, size = 0x48000, scoped, tag = 'scratch operand']
  %s0 = inlined_call_operand.hbm [shape: f32[2,16,16,128], index: 0, kind: input, shape index: {}]
  %s1 = inlined_call_operand.hbm [shape: bf16[128,128], index: 1, kind: input, shape index: {}]
  %s2 = inlined_call_operand.vmem [shape: f32[1,128], index: 2, kind: input, shape index: {}]
  %s3 = inlined_call_operand.hbm [shape: f32[3,3,128], index: 3, kind: input, shape index: {}]
  %s4 = inlined_call_operand.vmem [shape: f32[1,128], index: 4, kind: input, shape index: {}]
  %s5 = inlined_call_operand.hbm [shape: bf16[128,128], index: 5, kind: input, shape index: {}]
  %s6 = inlined_call_operand.vmem [shape: f32[1,128], index: 6, kind: input, shape index: {}]
  %s7 = inlined_call_operand.hbm [shape: f32[2,16,16,128], index: 7, kind: output, shape index: {}]
  %s8 = sld [smem:[#allocation0]]
  $region77: #{tpu_custom_call.1} parent=0
    _
  %s10 = ssub.s32 1, %s8
  %s11 = scalar_select 0, %s10, %s8
  $region1: #{tpu_custom_call.1} parent=0
    #allocation3 [shape = 'u8[262144]{0}', space=vmem, size = 0x40000, scoped, tag = 'input window, operand 0']
    #allocation4 [shape = 's32[2]{0}', space=sflag, size = 0x8, scoped, tag = 'scoped memory for tpu_custom_call.1']
    #allocation5 [shape = 's32[2]{0}', space=sflag, size = 0x8, scoped, tag = 'scoped memory for tpu_custom_call.1']
    #allocation6 [shape = 'u8[32768]{0}', space=vmem, size = 0x8000, scoped, tag = 'input window, operand 1, single buffered']
    #allocation7 [shape = 's32[1]{0}', space=sflag, size = 0x4, scoped, tag = 'scoped memory for tpu_custom_call.1']
    #allocation8 [shape = 'u8[6144]{0}', space=vmem, size = 0x1800, scoped, tag = 'input window, operand 3, single buffered']
    #allocation9 [shape = 'u8[32768]{0}', space=vmem, size = 0x8000, scoped, tag = 'input window, operand 5, single buffered']
    #allocation10 [shape = 's32[1]{0}', space=sflag, size = 0x4, scoped, tag = 'scoped memory for tpu_custom_call.1']
    #allocation11 [shape = 'u8[262144]{0}', space=vmem, size = 0x40000, scoped, tag = 'output window, operand 0']
    %12 = vsyncpa [#allocation4], 0
    %s13 = scalar_lea.sflag [#allocation4], 1
    %14 = vsyncpa %s13, 0
    %15 = vsyncpa [#allocation7], 0
    %16 = vsyncpa [#allocation10], 0
    %17 = vsyncpa [#allocation5], 0
    %s18 = scalar_lea.sflag [#allocation5], 1
    %19 = vsyncpa %s18, 0
    loop: start=0, step=1, limit=4
    $region2: #{tpu_custom_call.1} parent=1 // loop_pre_header
      _
    $region3: #{tpu_custom_call.1} parent=1 // loop_header
      %s21 = sphi 0, %s25
      %p22 = scmp.ge.s32.totalorder %s21, 4
      %s31 = sphi 0, %s33
      %s34 = sphi 0, %s31
      %s35 = sphi 0, %s34
      %s51 = sphi 0, %s35
      %s55 = sphi 0, %s55
      %s57 = sphi 0, %s55
      %s58 = sphi 0, %s57
      %s72 = sphi 0, %s58
      %s76 = sphi 0, %s76
      %s78 = sphi 0, %s76
      %s79 = sphi 0, %s78
      %s93 = sphi 0, %s79
      %s97 = sphi 0, %s97
      %s99 = sphi 0, %s97
      %s100 = sphi 0, %s99
      %s114 = sphi 0, %s100
      %s118 = sphi 0, %s118
      %s120 = sphi 0, %s118
      %s121 = sphi 0, %s120
      %s135 = sphi 0, %s121
      %s139 = sphi 0, %s139
      %s141 = sphi 0, %s139
      %s142 = sphi 0, %s141
      %s156 = sphi 0, %s142
      %s160 = sphi 0, %s160
      %s162 = sphi 0, %s160
      %s163 = sphi 0, %s162
      %s177 = sphi 0, %s163
      %s183 = sphi 0, %s185
      %s186 = sphi 0, %s183
      %s187 = sphi 0, %s186
      %s203 = sphi 0, %s187
    $region4: #{tpu_custom_call.1} parent=1 // loop_header_branch
      %24 = sbr.rel (%p22) target = $region8
    $region5: #{tpu_custom_call.1} parent=1 // loop_body
      %s26 = ssub.s32 %s21, 1
      %s27 = ssub.s32 %s21, 2
      %s28 = sadd.s32 %s21, 1
      %s29 = ssub.s32 %s21, %s28
      %p30 = scmp.eq.s32.totalorder %s29, 0
      %s32 = sadd.s32 %s31, 1
      %s33 = scalar_select %p30, %s31, %s32
      %p36 = pneg %p30
      %p37 = scmp.eq.s32.totalorder %s21, 1
      %p38 = por %p36, %p37
      %p39 = scmp.ne.s32.totalorder %s31, %s34
      %p40 = scmp.eq.s32.totalorder %s21, 0
      %p41 = por %p39, %p40
      %p42 = scmp.ne.s32.totalorder %s31, %s34
      %p43 = scmp.eq.s32.totalorder %s26, 1
      %p44 = por %p42, %p43
      %p45 = scmp.ne.s32.totalorder %s34, %s35
      %p46 = scmp.eq.s32.totalorder %s26, 0
      %p47 = por %p45, %p46
      %p48 = scmp.ne.s32.totalorder %s34, %s35
      %p49 = scmp.eq.s32.totalorder %s27, 1
      %p50 = por %p48, %p49
      %p52 = scmp.ne.s32.totalorder %s35, %s51
      %p53 = scmp.eq.s32.totalorder %s27, 0
      %p54 = por %p52, %p53
      %s56 = sadd.s32 %s55, 1
      %p59 = scmp.eq.s32.totalorder %s21, 1
      %p60 = scmp.ne.s32.totalorder %s55, %s57
      %p61 = scmp.eq.s32.totalorder %s21, 0
      %p62 = por %p60, %p61
      %p63 = scmp.ne.s32.totalorder %s55, %s57
      %p64 = scmp.eq.s32.totalorder %s26, 1
      %p65 = por %p63, %p64
      %p66 = scmp.ne.s32.totalorder %s57, %s58
      %p67 = scmp.eq.s32.totalorder %s26, 0
      %p68 = por %p66, %p67
      %p69 = scmp.ne.s32.totalorder %s57, %s58
      %p70 = scmp.eq.s32.totalorder %s27, 1
      %p71 = por %p69, %p70
      %p73 = scmp.ne.s32.totalorder %s58, %s72
      %p74 = scmp.eq.s32.totalorder %s27, 0
      %p75 = por %p73, %p74
      %s77 = sadd.s32 %s76, 1
      %p80 = scmp.eq.s32.totalorder %s21, 1
      %p81 = scmp.ne.s32.totalorder %s76, %s78
      %p82 = scmp.eq.s32.totalorder %s21, 0
      %p83 = por %p81, %p82
      %p84 = scmp.ne.s32.totalorder %s76, %s78
      %p85 = scmp.eq.s32.totalorder %s26, 1
      %p86 = por %p84, %p85
      %p87 = scmp.ne.s32.totalorder %s78, %s79
      %p88 = scmp.eq.s32.totalorder %s26, 0
      %p89 = por %p87, %p88
      %p90 = scmp.ne.s32.totalorder %s78, %s79
      %p91 = scmp.eq.s32.totalorder %s27, 1
      %p92 = por %p90, %p91
      %p94 = scmp.ne.s32.totalorder %s79, %s93
      %p95 = scmp.eq.s32.totalorder %s27, 0
      %p96 = por %p94, %p95
      %s98 = sadd.s32 %s97, 1
      %p101 = scmp.eq.s32.totalorder %s21, 1
      %p102 = scmp.ne.s32.totalorder %s97, %s99
      %p103 = scmp.eq.s32.totalorder %s21, 0
      %p104 = por %p102, %p103
      %p105 = scmp.ne.s32.totalorder %s97, %s99
      %p106 = scmp.eq.s32.totalorder %s26, 1
      %p107 = por %p105, %p106
      %p108 = scmp.ne.s32.totalorder %s99, %s100
      %p109 = scmp.eq.s32.totalorder %s26, 0
      %p110 = por %p108, %p109
      %p111 = scmp.ne.s32.totalorder %s99, %s100
      %p112 = scmp.eq.s32.totalorder %s27, 1
      %p113 = por %p111, %p112
      %p115 = scmp.ne.s32.totalorder %s100, %s114
      %p116 = scmp.eq.s32.totalorder %s27, 0
      %p117 = por %p115, %p116
      %s119 = sadd.s32 %s118, 1
      %p122 = scmp.eq.s32.totalorder %s21, 1
      %p123 = scmp.ne.s32.totalorder %s118, %s120
      %p124 = scmp.eq.s32.totalorder %s21, 0
      %p125 = por %p123, %p124
      %p126 = scmp.ne.s32.totalorder %s118, %s120
      %p127 = scmp.eq.s32.totalorder %s26, 1
      %p128 = por %p126, %p127
      %p129 = scmp.ne.s32.totalorder %s120, %s121
      %p130 = scmp.eq.s32.totalorder %s26, 0
      %p131 = por %p129, %p130
      %p132 = scmp.ne.s32.totalorder %s120, %s121
      %p133 = scmp.eq.s32.totalorder %s27, 1
      %p134 = por %p132, %p133
      %p136 = scmp.ne.s32.totalorder %s121, %s135
      %p137 = scmp.eq.s32.totalorder %s27, 0
      %p138 = por %p136, %p137
      %s140 = sadd.s32 %s139, 1
      %p143 = scmp.eq.s32.totalorder %s21, 1
      %p144 = scmp.ne.s32.totalorder %s139, %s141
      %p145 = scmp.eq.s32.totalorder %s21, 0
      %p146 = por %p144, %p145
      %p147 = scmp.ne.s32.totalorder %s139, %s141
      %p148 = scmp.eq.s32.totalorder %s26, 1
      %p149 = por %p147, %p148
      %p150 = scmp.ne.s32.totalorder %s141, %s142
      %p151 = scmp.eq.s32.totalorder %s26, 0
      %p152 = por %p150, %p151
      %p153 = scmp.ne.s32.totalorder %s141, %s142
      %p154 = scmp.eq.s32.totalorder %s27, 1
      %p155 = por %p153, %p154
      %p157 = scmp.ne.s32.totalorder %s142, %s156
      %p158 = scmp.eq.s32.totalorder %s27, 0
      %p159 = por %p157, %p158
      %s161 = sadd.s32 %s160, 1
      %p164 = scmp.eq.s32.totalorder %s21, 1
      %p165 = scmp.ne.s32.totalorder %s160, %s162
      %p166 = scmp.eq.s32.totalorder %s21, 0
      %p167 = por %p165, %p166
      %p168 = scmp.ne.s32.totalorder %s160, %s162
      %p169 = scmp.eq.s32.totalorder %s26, 1
      %p170 = por %p168, %p169
      %p171 = scmp.ne.s32.totalorder %s162, %s163
      %p172 = scmp.eq.s32.totalorder %s26, 0
      %p173 = por %p171, %p172
      %p174 = scmp.ne.s32.totalorder %s162, %s163
      %p175 = scmp.eq.s32.totalorder %s27, 1
      %p176 = por %p174, %p175
      %p178 = scmp.ne.s32.totalorder %s163, %s177
      %p179 = scmp.eq.s32.totalorder %s27, 0
      %p180 = por %p178, %p179
      %s181 = ssub.s32 %s21, %s28
      %p182 = scmp.eq.s32.totalorder %s181, 0
      %s184 = sadd.s32 %s183, 1
      %s185 = scalar_select %p182, %s183, %s184
      %p188 = pneg %p182
      %p189 = scmp.eq.s32.totalorder %s21, 1
      %p190 = por %p188, %p189
      %p191 = scmp.ne.s32.totalorder %s183, %s186
      %p192 = scmp.eq.s32.totalorder %s21, 0
      %p193 = por %p191, %p192
      %p194 = scmp.ne.s32.totalorder %s183, %s186
      %p195 = scmp.eq.s32.totalorder %s26, 1
      %p196 = por %p194, %p195
      %p197 = scmp.ne.s32.totalorder %s186, %s187
      %p198 = scmp.eq.s32.totalorder %s26, 0
      %p199 = por %p197, %p198
      %p200 = scmp.ne.s32.totalorder %s186, %s187
      %p201 = scmp.eq.s32.totalorder %s27, 1
      %p202 = por %p200, %p201
      %p204 = scmp.ne.s32.totalorder %s187, %s203
      %p205 = scmp.eq.s32.totalorder %s27, 0
      %p206 = por %p204, %p205
      %p207 = scmp.le.s32.totalorder 1, %s21
      %p208 = scmp.lt.s32.totalorder %s21, 3
      %p209 = pnand %p207, %p208
      %p210 = pneg %p209
      // Predicated region
      $region9: #{tpu_custom_call.1} parent=5 // pred_check
        _
      $region10: #{tpu_custom_call.1} parent=5 // pred_check_branch
        %212 = sbr.rel (%p209) target = $region12
      $region11: #{tpu_custom_call.1} parent=5 // pred_region
        %s213 = ssub.s32 %s21, 1
        // Predicated region
        $region13: #{tpu_custom_call.1} parent=11 // pred_check
          %p214 = pneg %p68
        $region14: #{tpu_custom_call.1} parent=11 // pred_check_branch
          %216 = sbr.rel (%p214) target = $region16
        $region15: #{tpu_custom_call.1} parent=11 // pred_region
          %s218 = ssub.s32 1024, 1024
          %219 = vsyncadd [#allocation7], %s218
          %s220 = sshll.u32 [#allocation6], 4
          %s221 = int_to_ptr.vmem [resolvable:$true] %s220
          %226 = dma.hbm_to_vmem [thread:$0]  %s1, 1024, %s221, [#allocation7], 64, 64, 4
        $region16: #{tpu_custom_call.1} parent=11 // pred_fallthru
          _
        // Predicated region
        $region17: #{tpu_custom_call.1} parent=11 // pred_check
          %p227 = pneg %p89
        $region18: #{tpu_custom_call.1} parent=11 // pred_check_branch
          %229 = sbr.rel (%p227) target = $region20
        $region19: #{tpu_custom_call.1} parent=11 // pred_region
          _
        $region20: #{tpu_custom_call.1} parent=11 // pred_fallthru
          _
        // Predicated region
        $region21: #{tpu_custom_call.1} parent=11 // pred_check
          %p230 = pneg %p110
        $region22: #{tpu_custom_call.1} parent=11 // pred_check_branch
          %232 = sbr.rel (%p230) target = $region24
        $region23: #{tpu_custom_call.1} parent=11 // pred_region
          %s234 = ssub.s32 192, 192
          %235 = vsyncadd [#allocation7], %s234
          %s236 = sshll.u32 [#allocation8], 4
          %s237 = int_to_ptr.vmem [resolvable:$true] %s236
          %242 = dma.hbm_to_vmem [thread:$0]  %s3, 192, %s237, [#allocation7], 64, 64, 4
        $region24: #{tpu_custom_call.1} parent=11 // pred_fallthru
          _
        // Predicated region
        $region25: #{tpu_custom_call.1} parent=11 // pred_check
          %p243 = pneg %p131
        $region26: #{tpu_custom_call.1} parent=11 // pred_check_branch
          %245 = sbr.rel (%p243) target = $region28
        $region27: #{tpu_custom_call.1} parent=11 // pred_region
          _
        $region28: #{tpu_custom_call.1} parent=11 // pred_fallthru
          _
        // Predicated region
        $region29: #{tpu_custom_call.1} parent=11 // pred_check
          %p246 = pneg %p152
        $region30: #{tpu_custom_call.1} parent=11 // pred_check_branch
          %248 = sbr.rel (%p246) target = $region32
        $region31: #{tpu_custom_call.1} parent=11 // pred_region
          %s250 = ssub.s32 1024, 1024
          %251 = vsyncadd [#allocation10], %s250
          %s252 = sshll.u32 [#allocation9], 4
          %s253 = int_to_ptr.vmem [resolvable:$true] %s252
          %258 = dma.hbm_to_vmem [thread:$0]  %s5, 1024, %s253, [#allocation10], 64, 64, 4
        $region32: #{tpu_custom_call.1} parent=11 // pred_fallthru
          _
        // Predicated region
        $region33: #{tpu_custom_call.1} parent=11 // pred_check
          %p259 = pneg %p173
        $region34: #{tpu_custom_call.1} parent=11 // pred_check_branch
          %261 = sbr.rel (%p259) target = $region36
        $region35: #{tpu_custom_call.1} parent=11 // pred_region
          _
        $region36: #{tpu_custom_call.1} parent=11 // pred_fallthru
          _
      $region12: #{tpu_custom_call.1} parent=5 // pred_fallthru
        _
      %p262 = scmp.lt.s32.totalorder %s21, 2
      // Predicated region
      $region37: #{tpu_custom_call.1} parent=5 // pred_check
        %p263 = pneg %p262
      $region38: #{tpu_custom_call.1} parent=5 // pred_check_branch
        %265 = sbr.rel (%p263) target = $region40
      $region39: #{tpu_custom_call.1} parent=5 // pred_region
        // Predicated region
        $region41: #{tpu_custom_call.1} parent=39 // pred_check
          %p266 = pneg %p41
        $region42: #{tpu_custom_call.1} parent=39 // pred_check_branch
          %268 = sbr.rel (%p266) target = $region44
        $region43: #{tpu_custom_call.1} parent=39 // pred_region
          %s269 = sand.u32 %s31, 1
          %s270 = scalar_lea.sflag [#allocation4], %s269
          %s271 = sand.u32 %s31, 1
          %s272 = smul.addr %s271, 256
          %s273 = scalar_lea.vmem [#allocation3], %s272
          %s275 = ssub.s32 4096, 4096
          %276 = vsyncadd %s270, %s275
          %s277 = smul.addr %s21, 32
          %s278 = smul.addr %s277, 128
          %s279 = scalar_lea.hbm %s0, %s278
          %s280 = sshll.u32 %s273, 4
          %s281 = int_to_ptr.vmem [resolvable:$true] %s280
          %286 = dma.hbm_to_vmem [thread:$0]  %s279, 4096, %s281, %s270, 128, 128, 8
        $region44: #{tpu_custom_call.1} parent=39 // pred_fallthru
          _
      $region40: #{tpu_custom_call.1} parent=5 // pred_fallthru
        _
      %p287 = scmp.le.s32.totalorder 1, %s21
      %p288 = scmp.lt.s32.totalorder %s21, 3
      %p289 = pnand %p287, %p288
      %p290 = pneg %p289
      // Predicated region
      $region45: #{tpu_custom_call.1} parent=5 // pred_check
        _
      $region46: #{tpu_custom_call.1} parent=5 // pred_check_branch
        %292 = sbr.rel (%p289) target = $region48
      $region47: #{tpu_custom_call.1} parent=5 // pred_region
        %s293 = ssub.s32 %s21, 1
        %s294 = sand.u32 %s34, 1
        %s295 = scalar_lea.sflag [#allocation4], %s294
        %s296 = sand.u32 %s34, 1
        %s297 = smul.addr %s296, 256
        %s298 = scalar_lea.vmem [#allocation3], %s297
        // Predicated region
        $region49: #{tpu_custom_call.1} parent=47 // pred_check
          %p299 = pneg %p47
        $region50: #{tpu_custom_call.1} parent=47 // pred_check_branch
          %301 = sbr.rel (%p299) target = $region52
        $region51: #{tpu_custom_call.1} parent=47 // pred_region
          %302 = dma.done %s295, 4096
        $region52: #{tpu_custom_call.1} parent=47 // pred_fallthru
          _
        // Predicated region
        $region53: #{tpu_custom_call.1} parent=47 // pred_check
          %p303 = pneg %p68
        $region54: #{tpu_custom_call.1} parent=47 // pred_check_branch
          %305 = sbr.rel (%p303) target = $region56
        $region55: #{tpu_custom_call.1} parent=47 // pred_region
          %306 = dma.done [#allocation7], 1024
        $region56: #{tpu_custom_call.1} parent=47 // pred_fallthru
          _
        // Predicated region
        $region57: #{tpu_custom_call.1} parent=47 // pred_check
          %p307 = pneg %p110
        $region58: #{tpu_custom_call.1} parent=47 // pred_check_branch
          %309 = sbr.rel (%p307) target = $region60
        $region59: #{tpu_custom_call.1} parent=47 // pred_region
          %310 = dma.done [#allocation7], 192
        $region60: #{tpu_custom_call.1} parent=47 // pred_fallthru
          _
        // Predicated region
        $region61: #{tpu_custom_call.1} parent=47 // pred_check
          %p311 = pneg %p152
        $region62: #{tpu_custom_call.1} parent=47 // pred_check_branch
          %313 = sbr.rel (%p311) target = $region64
        $region63: #{tpu_custom_call.1} parent=47 // pred_region
          %314 = dma.done [#allocation10], 1024
        $region64: #{tpu_custom_call.1} parent=47 // pred_fallthru
          _
        %s315 = sand.u32 %s34, 1
        %s316 = scalar_lea.sflag [#allocation4], %s315
        %s317 = sand.u32 %s34, 1
        %s318 = smul.addr %s317, 256
        %s319 = scalar_lea.vmem [#allocation3], %s318
        %p320 = pneg %p47
        %p321 = pneg %p44
        %p322 = pneg %p68
        %p323 = pneg %p65
        %p324 = pneg %p89
        %p325 = pneg %p86
        %p326 = pneg %p110
        %p327 = pneg %p107
        %p328 = pneg %p131
        %p329 = pneg %p128
        %p330 = pneg %p152
        %p331 = pneg %p149
        %p332 = pneg %p173
        %p333 = pneg %p170
        %p334 = pneg %p199
        %p335 = pneg %p196
        %s336 = sand.u32 %s186, 1
        %s337 = scalar_lea.sflag [#allocation5], %s336
        %s338 = sand.u32 %s186, 1
        %s339 = smul.addr %s338, 256
        %s340 = scalar_lea.vmem [#allocation11], %s339
        %v342 = vld [vmem:[%s298] sm:$0xff]
        %v343 = vld [vmem:[%s298 + $0x8] sm:$0xff]
        %v344 = vld [vmem:[%s298 + $0x10] sm:$0xff]
        %v345 = vld [vmem:[%s298 + $0x18] sm:$0xff]
        %v346 = vld [vmem:[%s298 + $0x20] sm:$0xff]
        %v347 = vld [vmem:[%s298 + $0x28] sm:$0xff]
        %v348 = vld [vmem:[%s298 + $0x30] sm:$0xff]
        %v349 = vld [vmem:[%s298 + $0x38] sm:$0xff]
        %v350 = vld [vmem:[%s298 + $0x40] sm:$0xff]
        %v351 = vld [vmem:[%s298 + $0x48] sm:$0xff]
        %v352 = vld [vmem:[%s298 + $0x50] sm:$0xff]
        %v353 = vld [vmem:[%s298 + $0x58] sm:$0xff]
        %v354 = vld [vmem:[%s298 + $0x60] sm:$0xff]
        %v355 = vld [vmem:[%s298 + $0x68] sm:$0xff]
        %v356 = vld [vmem:[%s298 + $0x70] sm:$0xff]
        %v357 = vld [vmem:[%s298 + $0x78] sm:$0xff]
        %v358 = vld [vmem:[%s298 + $0x80] sm:$0xff]
        %v359 = vld [vmem:[%s298 + $0x88] sm:$0xff]
        %v360 = vld [vmem:[%s298 + $0x90] sm:$0xff]
        %v361 = vld [vmem:[%s298 + $0x98] sm:$0xff]
        %v362 = vld [vmem:[%s298 + $0xa0] sm:$0xff]
        %v363 = vld [vmem:[%s298 + $0xa8] sm:$0xff]
        %v364 = vld [vmem:[%s298 + $0xb0] sm:$0xff]
        %v365 = vld [vmem:[%s298 + $0xb8] sm:$0xff]
        %v366 = vld [vmem:[%s298 + $0xc0] sm:$0xff]
        %v367 = vld [vmem:[%s298 + $0xc8] sm:$0xff]
        %v368 = vld [vmem:[%s298 + $0xd0] sm:$0xff]
        %v369 = vld [vmem:[%s298 + $0xd8] sm:$0xff]
        %v370 = vld [vmem:[%s298 + $0xe0] sm:$0xff]
        %v371 = vld [vmem:[%s298 + $0xe8] sm:$0xff]
        %v372 = vld [vmem:[%s298 + $0xf0] sm:$0xff]
        %v373 = vld [vmem:[%s298 + $0xf8] sm:$0xff]
        %v374 = vpack.c.bf16 %v343, %v342
        %v375 = vpack.c.bf16 %v345, %v344
        %v376 = vpack.c.bf16 %v347, %v346
        %v377 = vpack.c.bf16 %v349, %v348
        %v378 = vpack.c.bf16 %v351, %v350
        %v379 = vpack.c.bf16 %v353, %v352
        %v380 = vpack.c.bf16 %v355, %v354
        %v381 = vpack.c.bf16 %v357, %v356
        %v382 = vpack.c.bf16 %v359, %v358
        %v383 = vpack.c.bf16 %v361, %v360
        %v384 = vpack.c.bf16 %v363, %v362
        %v385 = vpack.c.bf16 %v365, %v364
        %v386 = vpack.c.bf16 %v367, %v366
        %v387 = vpack.c.bf16 %v369, %v368
        %v388 = vpack.c.bf16 %v371, %v370
        %v389 = vpack.c.bf16 %v373, %v372
        %v390 = vld [vmem:[#allocation6] sm:$0xf]
        %v391 = vld [vmem:[#allocation6 + $0x4] sm:$0xf]
        %v392 = vld [vmem:[#allocation6 + $0x8] sm:$0xf]
        %v393 = vld [vmem:[#allocation6 + $0xc] sm:$0xf]
        %v394 = vld [vmem:[#allocation6 + $0x10] sm:$0xf]
        %v395 = vld [vmem:[#allocation6 + $0x14] sm:$0xf]
        %v396 = vld [vmem:[#allocation6 + $0x18] sm:$0xf]
        %v397 = vld [vmem:[#allocation6 + $0x1c] sm:$0xf]
        %v398 = vld [vmem:[#allocation6 + $0x20] sm:$0xf]
        %v399 = vld [vmem:[#allocation6 + $0x24] sm:$0xf]
        %v400 = vld [vmem:[#allocation6 + $0x28] sm:$0xf]
        %v401 = vld [vmem:[#allocation6 + $0x2c] sm:$0xf]
        %v402 = vld [vmem:[#allocation6 + $0x30] sm:$0xf]
        %v403 = vld [vmem:[#allocation6 + $0x34] sm:$0xf]
        %v404 = vld [vmem:[#allocation6 + $0x38] sm:$0xf]
        %v405 = vld [vmem:[#allocation6 + $0x3c] sm:$0xf]
        %v406 = vld [vmem:[%s2] sm:$0x1]
        %v408 = vlaneseq
        %v409 = vshrl.u32 %v408, 7
        %v410 = vsub.s32 0, %v409
        %v411 = vrot.slane %v406, %v410
        %v429 = vunpack.c.l.b16 %v390
        %v430 = vunpack.c.l.b16 %v391
        %v431 = vunpack.c.l.b16 %v392
        %v432 = vunpack.c.l.b16 %v393
        %v433 = vunpack.c.l.b16 %v394
        %v434 = vunpack.c.l.b16 %v395
        %v435 = vunpack.c.l.b16 %v396
        %v436 = vunpack.c.l.b16 %v397
        %v437 = vunpack.c.l.b16 %v398
        %v438 = vunpack.c.l.b16 %v399
        %v439 = vunpack.c.l.b16 %v400
        %v440 = vunpack.c.l.b16 %v401
        %v441 = vunpack.c.l.b16 %v402
        %v442 = vunpack.c.l.b16 %v403
        %v443 = vunpack.c.l.b16 %v404
        %v444 = vunpack.c.l.b16 %v405
        %v445 = vpack.c.b16 %v430, %v429
        %v446 = vpack.c.b16 %v432, %v431
        %v447 = vpack.c.b16 %v434, %v433
        %v448 = vpack.c.b16 %v436, %v435
        %v449 = vpack.c.b16 %v438, %v437
        %v450 = vpack.c.b16 %v440, %v439
        %v451 = vpack.c.b16 %v442, %v441
        %v452 = vpack.c.b16 %v444, %v443
        %461 = vmatprep.subr.bf16.mxu0 0
        %462 = vmatpush1.bf16.msra.mxu0 %v445
        %463 = vmatprep.subr.bf16.mxu0 0
        %464 = vmatpush1.bf16.msra.mxu0 %v446
        %465 = vmatprep.subr.bf16.mxu0 0
        %466 = vmatpush1.bf16.msra.mxu0 %v447
        %467 = vmatprep.subr.bf16.mxu0 0
        %468 = vmatpush1.bf16.msra.mxu0 %v448
        %469 = vmatprep.subr.bf16.mxu0 0
        %470 = vmatpush1.bf16.msra.mxu0 %v449
        %471 = vmatprep.subr.bf16.mxu0 0
        %472 = vmatpush1.bf16.msra.mxu0 %v450
        %473 = vmatprep.subr.bf16.mxu0 0
        %474 = vmatpush1.bf16.msra.mxu0 %v451
        %475 = vmatprep.subr.bf16.mxu0 0
        %476 = vmatpush1.bf16.msra.mxu0 %v452
        %477 = vmatprep.subr.bf16.mxu0 0
        %478 = vmatpush1.bf16.msra.mxu0 0
        %479 = vmatprep.subr.bf16.mxu0 0
        %480 = vmatpush1.bf16.msra.mxu0 0
        %481 = vmatprep.subr.bf16.mxu0 0
        %482 = vmatpush1.bf16.msra.mxu0 0
        %483 = vmatprep.subr.bf16.mxu0 0
        %484 = vmatpush1.bf16.msra.mxu0 0
        %485 = vmatprep.subr.bf16.mxu0 0
        %486 = vmatpush1.bf16.msra.mxu0 0
        %487 = vmatprep.subr.bf16.mxu0 0
        %488 = vmatpush1.bf16.msra.mxu0 0
        %489 = vmatprep.subr.bf16.mxu0 0
        %490 = vmatpush1.bf16.msra.mxu0 0
        %491 = vmatprep.subr.bf16.mxu0 0
        %492 = vmatpush1.bf16.msra.mxu0 0
        %493 = vmatprep.mubr.bf16.mxu0 0
        %494 = vmatmul.mubr.bf16.gmra.mrb[0].mxu0 %v374
        %v495 = vpop.f32.mrb[0].mxu0
        %v496 = vadd.f32 %v411, %v495
        %v497 = vpop.f32.mrb[0].mxu0
        %v498 = vpop.f32.mrb[0].mxu0
        %v499 = vadd.f32 %v411, %v498
        %v500 = vpop.f32.mrb[0].mxu0
        %501 = vmatprep.mubr.bf16.mxu0 0
        %502 = vmatmul.mubr.bf16.gmra.mrb[0].mxu0 %v375
        %v503 = vpop.f32.mrb[0].mxu0
        %v504 = vadd.f32 %v411, %v503
        %v505 = vpop.f32.mrb[0].mxu0
        %v506 = vpop.f32.mrb[0].mxu0
        %v507 = vadd.f32 %v411, %v506
        %v508 = vpop.f32.mrb[0].mxu0
        %509 = vmatprep.mubr.bf16.mxu0 0
        %510 = vmatmul.mubr.bf16.gmra.mrb[0].mxu0 %v376
        %v511 = vpop.f32.mrb[0].mxu0
        %v512 = vadd.f32 %v411, %v511
        %v513 = vpop.f32.mrb[0].mxu0
        %v514 = vpop.f32.mrb[0].mxu0
        %v515 = vadd.f32 %v411, %v514
        %v516 = vpop.f32.mrb[0].mxu0
        %517 = vmatprep.mubr.bf16.mxu0 0
        %518 = vmatmul.mubr.bf16.gmra.mrb[0].mxu0 %v377
        %v519 = vpop.f32.mrb[0].mxu0
        %v520 = vadd.f32 %v411, %v519
        %v521 = vpop.f32.mrb[0].mxu0
        %v522 = vpop.f32.mrb[0].mxu0
        %v523 = vadd.f32 %v411, %v522
        %v524 = vpop.f32.mrb[0].mxu0
        %525 = vmatprep.mubr.bf16.mxu0 0
        %526 = vmatmul.mubr.bf16.gmra.mrb[0].mxu0 %v378
        %v527 = vpop.f32.mrb[0].mxu0
        %v528 = vadd.f32 %v411, %v527
        %v529 = vpop.f32.mrb[0].mxu0
        %v530 = vpop.f32.mrb[0].mxu0
        %v531 = vadd.f32 %v411, %v530
        %v532 = vpop.f32.mrb[0].mxu0
        %533 = vmatprep.mubr.bf16.mxu0 0
        %534 = vmatmul.mubr.bf16.gmra.mrb[0].mxu0 %v379
        %v535 = vpop.f32.mrb[0].mxu0
        %v536 = vadd.f32 %v411, %v535
        %v537 = vpop.f32.mrb[0].mxu0
        %v538 = vpop.f32.mrb[0].mxu0
        %v539 = vadd.f32 %v411, %v538
        %v540 = vpop.f32.mrb[0].mxu0
        %541 = vmatprep.mubr.bf16.mxu0 0
        %542 = vmatmul.mubr.bf16.gmra.mrb[0].mxu0 %v380
        %v543 = vpop.f32.mrb[0].mxu0
        %v544 = vadd.f32 %v411, %v543
        %v545 = vpop.f32.mrb[0].mxu0
        %v546 = vpop.f32.mrb[0].mxu0
        %v547 = vadd.f32 %v411, %v546
        %v548 = vpop.f32.mrb[0].mxu0
        %549 = vmatprep.mubr.bf16.mxu0 0
        %550 = vmatmul.mubr.bf16.gmra.mrb[0].mxu0 %v381
        %v551 = vpop.f32.mrb[0].mxu0
        %v552 = vadd.f32 %v411, %v551
        %v553 = vpop.f32.mrb[0].mxu0
        %v554 = vpop.f32.mrb[0].mxu0
        %v555 = vadd.f32 %v411, %v554
        %v556 = vpop.f32.mrb[0].mxu0
        %557 = vmatprep.mubr.bf16.mxu0 0
        %558 = vmatmul.mubr.bf16.gmra.mrb[0].mxu0 %v382
        %v559 = vpop.f32.mrb[0].mxu0
        %v560 = vadd.f32 %v411, %v559
        %v561 = vpop.f32.mrb[0].mxu0
        %v562 = vpop.f32.mrb[0].mxu0
        %v563 = vadd.f32 %v411, %v562
        %v564 = vpop.f32.mrb[0].mxu0
        %565 = vmatprep.mubr.bf16.mxu0 0
        %566 = vmatmul.mubr.bf16.gmra.mrb[0].mxu0 %v383
        %v567 = vpop.f32.mrb[0].mxu0
        %v568 = vadd.f32 %v411, %v567
        %v569 = vpop.f32.mrb[0].mxu0
        %v570 = vpop.f32.mrb[0].mxu0
        %v571 = vadd.f32 %v411, %v570
        %v572 = vpop.f32.mrb[0].mxu0
        %573 = vmatprep.mubr.bf16.mxu0 0
        %574 = vmatmul.mubr.bf16.gmra.mrb[0].mxu0 %v384
        %v575 = vpop.f32.mrb[0].mxu0
        %v576 = vadd.f32 %v411, %v575
        %v577 = vpop.f32.mrb[0].mxu0
        %v578 = vpop.f32.mrb[0].mxu0
        %v579 = vadd.f32 %v411, %v578
        %v580 = vpop.f32.mrb[0].mxu0
        %581 = vmatprep.mubr.bf16.mxu0 0
        %582 = vmatmul.mubr.bf16.gmra.mrb[0].mxu0 %v385
        %v583 = vpop.f32.mrb[0].mxu0
        %v584 = vadd.f32 %v411, %v583
        %v585 = vpop.f32.mrb[0].mxu0
        %v586 = vpop.f32.mrb[0].mxu0
        %v587 = vadd.f32 %v411, %v586
        %v588 = vpop.f32.mrb[0].mxu0
        %589 = vmatprep.mubr.bf16.mxu0 0
        %590 = vmatmul.mubr.bf16.gmra.mrb[0].mxu0 %v386
        %v591 = vpop.f32.mrb[0].mxu0
        %v592 = vadd.f32 %v411, %v591
        %v593 = vpop.f32.mrb[0].mxu0
        %v594 = vpop.f32.mrb[0].mxu0
        %v595 = vadd.f32 %v411, %v594
        %v596 = vpop.f32.mrb[0].mxu0
        %597 = vmatprep.mubr.bf16.mxu0 0
        %598 = vmatmul.mubr.bf16.gmra.mrb[0].mxu0 %v387
        %v599 = vpop.f32.mrb[0].mxu0
        %v600 = vadd.f32 %v411, %v599
        %v601 = vpop.f32.mrb[0].mxu0
        %v602 = vpop.f32.mrb[0].mxu0
        %v603 = vadd.f32 %v411, %v602
        %v604 = vpop.f32.mrb[0].mxu0
        %605 = vmatprep.mubr.bf16.mxu0 0
        %606 = vmatmul.mubr.bf16.gmra.mrb[0].mxu0 %v388
        %v607 = vpop.f32.mrb[0].mxu0
        %v608 = vadd.f32 %v411, %v607
        %v609 = vpop.f32.mrb[0].mxu0
        %v610 = vpop.f32.mrb[0].mxu0
        %v611 = vadd.f32 %v411, %v610
        %v612 = vpop.f32.mrb[0].mxu0
        %613 = vmatprep.mubr.bf16.mxu0 0
        %614 = vmatmul.mubr.bf16.gmra.mrb[0].mxu0 %v389
        %v615 = vpop.f32.mrb[0].mxu0
        %v616 = vadd.f32 %v411, %v615
        %v617 = vpop.f32.mrb[0].mxu0
        %v618 = vpop.f32.mrb[0].mxu0
        %v619 = vadd.f32 %v411, %v618
        %v620 = vpop.f32.mrb[0].mxu0
        %621 = vdwg.mxu0
        %v622 = vmax.f32 %v496, 0.0
        %v623 = vmax.f32 %v499, 0.0
        %v624 = vmax.f32 %v504, 0.0
        %v625 = vmax.f32 %v507, 0.0
        %v626 = vmax.f32 %v512, 0.0
        %v627 = vmax.f32 %v515, 0.0
        %v628 = vmax.f32 %v520, 0.0
        %v629 = vmax.f32 %v523, 0.0
        %v630 = vmax.f32 %v528, 0.0
        %v631 = vmax.f32 %v531, 0.0
        %v632 = vmax.f32 %v536, 0.0
        %v633 = vmax.f32 %v539, 0.0
        %v634 = vmax.f32 %v544, 0.0
        %v635 = vmax.f32 %v547, 0.0
        %v636 = vmax.f32 %v552, 0.0
        %v637 = vmax.f32 %v555, 0.0
        %v638 = vmax.f32 %v560, 0.0
        %v639 = vmax.f32 %v563, 0.0
        %v640 = vmax.f32 %v568, 0.0
        %v641 = vmax.f32 %v571, 0.0
        %v642 = vmax.f32 %v576, 0.0
        %v643 = vmax.f32 %v579, 0.0
        %v644 = vmax.f32 %v584, 0.0
        %v645 = vmax.f32 %v587, 0.0
        %v646 = vmax.f32 %v592, 0.0
        %v647 = vmax.f32 %v595, 0.0
        %v648 = vmax.f32 %v600, 0.0
        %v649 = vmax.f32 %v603, 0.0
        %v650 = vmax.f32 %v608, 0.0
        %v651 = vmax.f32 %v611, 0.0
        %v652 = vmax.f32 %v616, 0.0
        %v653 = vmax.f32 %v619, 0.0
        %v654 = vmin.f32 %v622, 6.0
        %v655 = vmin.f32 %v623, 6.0
        %v656 = vmin.f32 %v624, 6.0
        %v657 = vmin.f32 %v625, 6.0
        %v658 = vmin.f32 %v626, 6.0
        %v659 = vmin.f32 %v627, 6.0
        %v660 = vmin.f32 %v628, 6.0
        %v661 = vmin.f32 %v629, 6.0
        %v662 = vmin.f32 %v630, 6.0
        %v663 = vmin.f32 %v631, 6.0
        %v664 = vmin.f32 %v632, 6.0
        %v665 = vmin.f32 %v633, 6.0
        %v666 = vmin.f32 %v634, 6.0
        %v667 = vmin.f32 %v635, 6.0
        %v668 = vmin.f32 %v636, 6.0
        %v669 = vmin.f32 %v637, 6.0
        %v670 = vmin.f32 %v638, 6.0
        %v671 = vmin.f32 %v639, 6.0
        %v672 = vmin.f32 %v640, 6.0
        %v673 = vmin.f32 %v641, 6.0
        %v674 = vmin.f32 %v642, 6.0
        %v675 = vmin.f32 %v643, 6.0
        %v676 = vmin.f32 %v644, 6.0
        %v677 = vmin.f32 %v645, 6.0
        %v678 = vmin.f32 %v646, 6.0
        %v679 = vmin.f32 %v647, 6.0
        %v680 = vmin.f32 %v648, 6.0
        %v681 = vmin.f32 %v649, 6.0
        %v682 = vmin.f32 %v650, 6.0
        %v683 = vmin.f32 %v651, 6.0
        %v684 = vmin.f32 %v652, 6.0
        %v685 = vmin.f32 %v653, 6.0
        %s686 = scalar_lea.vmem [#allocation2], 32
        %687 = vst [vmem:[%s686 + $0x8] sm:$0xff] %v654
        %688 = vst [vmem:[%s686 + $0x10] sm:$0xff] %v655
        %689 = vst [vmem:[%s686 + $0x28] sm:$0xff] %v656
        %690 = vst [vmem:[%s686 + $0x30] sm:$0xff] %v657
        %691 = vst [vmem:[%s686 + $0x48] sm:$0xff] %v658
        %692 = vst [vmem:[%s686 + $0x50] sm:$0xff] %v659
        %693 = vst [vmem:[%s686 + $0x68] sm:$0xff] %v660
        %694 = vst [vmem:[%s686 + $0x70] sm:$0xff] %v661
        %695 = vst [vmem:[%s686 + $0x88] sm:$0xff] %v662
        %696 = vst [vmem:[%s686 + $0x90] sm:$0xff] %v663
        %697 = vst [vmem:[%s686 + $0xa8] sm:$0xff] %v664
        %698 = vst [vmem:[%s686 + $0xb0] sm:$0xff] %v665
        %699 = vst [vmem:[%s686 + $0xc8] sm:$0xff] %v666
        %700 = vst [vmem:[%s686 + $0xd0] sm:$0xff] %v667
        %701 = vst [vmem:[%s686 + $0xe8] sm:$0xff] %v668
        %702 = vst [vmem:[%s686 + $0xf0] sm:$0xff] %v669
        %703 = vst [vmem:[%s686 + $0x108] sm:$0xff] %v670
        %704 = vst [vmem:[%s686 + $0x110] sm:$0xff] %v671
        %705 = vst [vmem:[%s686 + $0x128] sm:$0xff] %v672
        %706 = vst [vmem:[%s686 + $0x130] sm:$0xff] %v673
        %707 = vst [vmem:[%s686 + $0x148] sm:$0xff] %v674
        %708 = vst [vmem:[%s686 + $0x150] sm:$0xff] %v675
        %709 = vst [vmem:[%s686 + $0x168] sm:$0xff] %v676
        %710 = vst [vmem:[%s686 + $0x170] sm:$0xff] %v677
        %711 = vst [vmem:[%s686 + $0x188] sm:$0xff] %v678
        %712 = vst [vmem:[%s686 + $0x190] sm:$0xff] %v679
        %713 = vst [vmem:[%s686 + $0x1a8] sm:$0xff] %v680
        %714 = vst [vmem:[%s686 + $0x1b0] sm:$0xff] %v681
        %715 = vst [vmem:[%s686 + $0x1c8] sm:$0xff] %v682
        %716 = vst [vmem:[%s686 + $0x1d0] sm:$0xff] %v683
        %717 = vst [vmem:[%s686 + $0x1e8] sm:$0xff] %v684
        %718 = vst [vmem:[%s686 + $0x1f0] sm:$0xff] %v685
        %719 = vst [vmem:[#allocation2] sm:$0xff] 0.0
        %720 = vst [vmem:[#allocation2 + $0x8] sm:$0xff] 0.0
        %721 = vst [vmem:[#allocation2 + $0x10] sm:$0xff] 0.0
        %722 = vst [vmem:[#allocation2 + $0x18] sm:$0x1] 0.0
        %s723 = scalar_lea.vmem [#allocation2], 544
        %724 = vst [vmem:[%s723] sm:$0xff] 0.0
        %725 = vst [vmem:[%s723 + $0x8] sm:$0xff] 0.0
        %726 = vst [vmem:[%s723 + $0x10] sm:$0xff] 0.0
        %727 = vst [vmem:[%s723 + $0x18] sm:$0x1] 0.0
        %728 = vst [vmem:[%s686 + $0x7] sm:$0x1] 0.0
        %729 = vst [vmem:[%s686 + $0x27] sm:$0x1] 0.0
        %730 = vst [vmem:[%s686 + $0x47] sm:$0x1] 0.0
        %731 = vst [vmem:[%s686 + $0x67] sm:$0x1] 0.0
        %732 = vst [vmem:[%s686 + $0x87] sm:$0x1] 0.0
        %733 = vst [vmem:[%s686 + $0xa7] sm:$0x1] 0.0
        %734 = vst [vmem:[%s686 + $0xc7] sm:$0x1] 0.0
        %735 = vst [vmem:[%s686 + $0xe7] sm:$0x1] 0.0
        %736 = vst [vmem:[%s686 + $0x107] sm:$0x1] 0.0
        %737 = vst [vmem:[%s686 + $0x127] sm:$0x1] 0.0
        %738 = vst [vmem:[%s686 + $0x147] sm:$0x1] 0.0
        %739 = vst [vmem:[%s686 + $0x167] sm:$0x1] 0.0
        %740 = vst [vmem:[%s686 + $0x187] sm:$0x1] 0.0
        %741 = vst [vmem:[%s686 + $0x1a7] sm:$0x1] 0.0
        %742 = vst [vmem:[%s686 + $0x1c7] sm:$0x1] 0.0
        %743 = vst [vmem:[%s686 + $0x1e7] sm:$0x1] 0.0
        %744 = vst [vmem:[%s686 + $0x18] sm:$0x1] 0.0
        %745 = vst [vmem:[%s686 + $0x38] sm:$0x1] 0.0
        %746 = vst [vmem:[%s686 + $0x58] sm:$0x1] 0.0
        %747 = vst [vmem:[%s686 + $0x78] sm:$0x1] 0.0
        %748 = vst [vmem:[%s686 + $0x98] sm:$0x1] 0.0
        %749 = vst [vmem:[%s686 + $0xb8] sm:$0x1] 0.0
        %750 = vst [vmem:[%s686 + $0xd8] sm:$0x1] 0.0
        %751 = vst [vmem:[%s686 + $0xf8] sm:$0x1] 0.0
        %752 = vst [vmem:[%s686 + $0x118] sm:$0x1] 0.0
        %753 = vst [vmem:[%s686 + $0x138] sm:$0x1] 0.0
        %754 = vst [vmem:[%s686 + $0x158] sm:$0x1] 0.0
        %755 = vst [vmem:[%s686 + $0x178] sm:$0x1] 0.0
        %756 = vst [vmem:[%s686 + $0x198] sm:$0x1] 0.0
        %757 = vst [vmem:[%s686 + $0x1b8] sm:$0x1] 0.0
        %758 = vst [vmem:[%s686 + $0x1d8] sm:$0x1] 0.0
        %759 = vst [vmem:[%s686 + $0x1f8] sm:$0x1] 0.0
        %v760 = vld [vmem:[#allocation8] sm:$0x7]
        %v761 = vld [vmem:[#allocation8 + $0x4] sm:$0x7]
        %v762 = vld [vmem:[#allocation8 + $0x8] sm:$0x7]
        %v763 = vld [vmem:[#allocation2 + $0x7] sm:$0xff]
        %v764 = vld [vmem:[#allocation2 + $0xf] sm:$0xff]
        %v765 = vld [vmem:[#allocation2 + $0x27] sm:$0xff]
        %v766 = vld [vmem:[#allocation2 + $0x2f] sm:$0xff]
        %v767 = vld [vmem:[#allocation2 + $0x47] sm:$0xff]
        %v768 = vld [vmem:[#allocation2 + $0x4f] sm:$0xff]
        %v769 = vld [vmem:[#allocation2 + $0x67] sm:$0xff]
        %v770 = vld [vmem:[#allocation2 + $0x6f] sm:$0xff]
        %v771 = vld [vmem:[#allocation2 + $0x87] sm:$0xff]
        %v772 = vld [vmem:[#allocation2 + $0x8f] sm:$0xff]
        %v773 = vld [vmem:[#allocation2 + $0xa7] sm:$0xff]
        %v774 = vld [vmem:[#allocation2 + $0xaf] sm:$0xff]
        %v775 = vld [vmem:[#allocation2 + $0xc7] sm:$0xff]
        %v776 = vld [vmem:[#allocation2 + $0xcf] sm:$0xff]
        %v777 = vld [vmem:[#allocation2 + $0xe7] sm:$0xff]
        %v778 = vld [vmem:[#allocation2 + $0xef] sm:$0xff]
        %v779 = vld [vmem:[#allocation2 + $0x107] sm:$0xff]
        %v780 = vld [vmem:[#allocation2 + $0x10f] sm:$0xff]
        %v781 = vld [vmem:[#allocation2 + $0x127] sm:$0xff]
        %v782 = vld [vmem:[#allocation2 + $0x12f] sm:$0xff]
        %v783 = vld [vmem:[#allocation2 + $0x147] sm:$0xff]
        %v784 = vld [vmem:[#allocation2 + $0x14f] sm:$0xff]
        %v785 = vld [vmem:[#allocation2 + $0x167] sm:$0xff]
        %v786 = vld [vmem:[#allocation2 + $0x16f] sm:$0xff]
        %v787 = vld [vmem:[#allocation2 + $0x187] sm:$0xff]
        %v788 = vld [vmem:[#allocation2 + $0x18f] sm:$0xff]
        %v789 = vld [vmem:[#allocation2 + $0x1a7] sm:$0xff]
        %v790 = vld [vmem:[#allocation2 + $0x1af] sm:$0xff]
        %v791 = vld [vmem:[#allocation2 + $0x1c7] sm:$0xff]
        %v792 = vld [vmem:[#allocation2 + $0x1cf] sm:$0xff]
        %v793 = vld [vmem:[#allocation2 + $0x1e7] sm:$0xff]
        %v794 = vld [vmem:[#allocation2 + $0x1ef] sm:$0xff]
        %v795 = vlaneseq
        %v796 = vshrl.u32 %v795, 7
        %v797 = vsub.s32 0, %v796
        %v798 = vrot.slane %v760, %v797
        %v799 = vmul.f32 %v763, %v798
        %v800 = vmul.f32 %v764, %v798
        %v801 = vmul.f32 %v765, %v798
        %v802 = vmul.f32 %v766, %v798
        %v803 = vmul.f32 %v767, %v798
        %v804 = vmul.f32 %v768, %v798
        %v805 = vmul.f32 %v769, %v798
        %v806 = vmul.f32 %v770, %v798
        %v807 = vmul.f32 %v771, %v798
        %v808 = vmul.f32 %v772, %v798
        %v809 = vmul.f32 %v773, %v798
        %v810 = vmul.f32 %v774, %v798
        %v811 = vmul.f32 %v775, %v798
        %v812 = vmul.f32 %v776, %v798
        %v813 = vmul.f32 %v777, %v798
        %v814 = vmul.f32 %v778, %v798
        %v815 = vmul.f32 %v779, %v798
        %v816 = vmul.f32 %v780, %v798
        %v817 = vmul.f32 %v781, %v798
        %v818 = vmul.f32 %v782, %v798
        %v819 = vmul.f32 %v783, %v798
        %v820 = vmul.f32 %v784, %v798
        %v821 = vmul.f32 %v785, %v798
        %v822 = vmul.f32 %v786, %v798
        %v823 = vmul.f32 %v787, %v798
        %v824 = vmul.f32 %v788, %v798
        %v825 = vmul.f32 %v789, %v798
        %v826 = vmul.f32 %v790, %v798
        %v827 = vmul.f32 %v791, %v798
        %v828 = vmul.f32 %v792, %v798
        %v829 = vmul.f32 %v793, %v798
        %v830 = vmul.f32 %v794, %v798
        %v831 = vadd.f32 %v799, 0.0
        %v832 = vadd.f32 %v800, 0.0
        %v833 = vadd.f32 %v801, 0.0
        %v834 = vadd.f32 %v802, 0.0
        %v835 = vadd.f32 %v803, 0.0
        %v836 = vadd.f32 %v804, 0.0
        %v837 = vadd.f32 %v805, 0.0
        %v838 = vadd.f32 %v806, 0.0
        %v839 = vadd.f32 %v807, 0.0
        %v840 = vadd.f32 %v808, 0.0
        %v841 = vadd.f32 %v809, 0.0
        %v842 = vadd.f32 %v810, 0.0
        %v843 = vadd.f32 %v811, 0.0
        %v844 = vadd.f32 %v812, 0.0
        %v845 = vadd.f32 %v813, 0.0
        %v846 = vadd.f32 %v814, 0.0
        %v847 = vadd.f32 %v815, 0.0
        %v848 = vadd.f32 %v816, 0.0
        %v849 = vadd.f32 %v817, 0.0
        %v850 = vadd.f32 %v818, 0.0
        %v851 = vadd.f32 %v819, 0.0
        %v852 = vadd.f32 %v820, 0.0
        %v853 = vadd.f32 %v821, 0.0
        %v854 = vadd.f32 %v822, 0.0
        %v855 = vadd.f32 %v823, 0.0
        %v856 = vadd.f32 %v824, 0.0
        %v857 = vadd.f32 %v825, 0.0
        %v858 = vadd.f32 %v826, 0.0
        %v859 = vadd.f32 %v827, 0.0
        %v860 = vadd.f32 %v828, 0.0
        %v861 = vadd.f32 %v829, 0.0
        %v862 = vadd.f32 %v830, 0.0
        %v863 = vld [vmem:[#allocation2 + $0x8] sm:$0xff]
        %v864 = vld [vmem:[#allocation2 + $0x10] sm:$0xff]
        %v865 = vld [vmem:[#allocation2 + $0x28] sm:$0xff]
        %v866 = vld [vmem:[#allocation2 + $0x30] sm:$0xff]
        %v867 = vld [vmem:[#allocation2 + $0x48] sm:$0xff]
        %v868 = vld [vmem:[#allocation2 + $0x50] sm:$0xff]
        %v869 = vld [vmem:[#allocation2 + $0x68] sm:$0xff]
        %v870 = vld [vmem:[#allocation2 + $0x70] sm:$0xff]
        %v871 = vld [vmem:[#allocation2 + $0x88] sm:$0xff]
        %v872 = vld [vmem:[#allocation2 + $0x90] sm:$0xff]
        %v873 = vld [vmem:[#allocation2 + $0xa8] sm:$0xff]
        %v874 = vld [vmem:[#allocation2 + $0xb0] sm:$0xff]
        %v875 = vld [vmem:[#allocation2 + $0xc8] sm:$0xff]
        %v876 = vld [vmem:[#allocation2 + $0xd0] sm:$0xff]
        %v877 = vld [vmem:[#allocation2 + $0xe8] sm:$0xff]
        %v878 = vld [vmem:[#allocation2 + $0xf0] sm:$0xff]
        %v879 = vld [vmem:[#allocation2 + $0x108] sm:$0xff]
        %v880 = vld [vmem:[#allocation2 + $0x110] sm:$0xff]
        %v881 = vld [vmem:[#allocation2 + $0x128] sm:$0xff]
        %v882 = vld [vmem:[#allocation2 + $0x130] sm:$0xff]
        %v883 = vld [vmem:[#allocation2 + $0x148] sm:$0xff]
        %v884 = vld [vmem:[#allocation2 + $0x150] sm:$0xff]
        %v885 = vld [vmem:[#allocation2 + $0x168] sm:$0xff]
        %v886 = vld [vmem:[#allocation2 + $0x170] sm:$0xff]
        %v887 = vld [vmem:[#allocation2 + $0x188] sm:$0xff]
        %v888 = vld [vmem:[#allocation2 + $0x190] sm:$0xff]
        %v889 = vld [vmem:[#allocation2 + $0x1a8] sm:$0xff]
        %v890 = vld [vmem:[#allocation2 + $0x1b0] sm:$0xff]
        %v891 = vld [vmem:[#allocation2 + $0x1c8] sm:$0xff]
        %v892 = vld [vmem:[#allocation2 + $0x1d0] sm:$0xff]
        %v893 = vld [vmem:[#allocation2 + $0x1e8] sm:$0xff]
        %v894 = vld [vmem:[#allocation2 + $0x1f0] sm:$0xff]
        %v895 = vlaneseq
        %v896 = vshrl.u32 %v895, 7
        %v897 = vsub.s32 1, %v896
        %v898 = vrot.slane %v760, %v897
        %v899 = vmul.f32 %v863, %v898
        %v900 = vmul.f32 %v864, %v898
        %v901 = vmul.f32 %v865, %v898
        %v902 = vmul.f32 %v866, %v898
        %v903 = vmul.f32 %v867, %v898
        %v904 = vmul.f32 %v868, %v898
        %v905 = vmul.f32 %v869, %v898
        %v906 = vmul.f32 %v870, %v898
        %v907 = vmul.f32 %v871, %v898
        %v908 = vmul.f32 %v872, %v898
        %v909 = vmul.f32 %v873, %v898
        %v910 = vmul.f32 %v874, %v898
        %v911 = vmul.f32 %v875, %v898
        %v912 = vmul.f32 %v876, %v898
        %v913 = vmul.f32 %v877, %v898
        %v914 = vmul.f32 %v878, %v898
        %v915 = vmul.f32 %v879, %v898
        %v916 = vmul.f32 %v880, %v898
        %v917 = vmul.f32 %v881, %v898
        %v918 = vmul.f32 %v882, %v898
        %v919 = vmul.f32 %v883, %v898
        %v920 = vmul.f32 %v884, %v898
        %v921 = vmul.f32 %v885, %v898
        %v922 = vmul.f32 %v886, %v898
        %v923 = vmul.f32 %v887, %v898
        %v924 = vmul.f32 %v888, %v898
        %v925 = vmul.f32 %v889, %v898
        %v926 = vmul.f32 %v890, %v898
        %v927 = vmul.f32 %v891, %v898
        %v928 = vmul.f32 %v892, %v898
        %v929 = vmul.f32 %v893, %v898
        %v930 = vmul.f32 %v894, %v898
        %v931 = vadd.f32 %v831, %v899
        %v932 = vadd.f32 %v832, %v900
        %v933 = vadd.f32 %v833, %v901
        %v934 = vadd.f32 %v834, %v902
        %v935 = vadd.f32 %v835, %v903
        %v936 = vadd.f32 %v836, %v904
        %v937 = vadd.f32 %v837, %v905
        %v938 = vadd.f32 %v838, %v906
        %v939 = vadd.f32 %v839, %v907
        %v940 = vadd.f32 %v840, %v908
        %v941 = vadd.f32 %v841, %v909
        %v942 = vadd.f32 %v842, %v910
        %v943 = vadd.f32 %v843, %v911
        %v944 = vadd.f32 %v844, %v912
        %v945 = vadd.f32 %v845, %v913
        %v946 = vadd.f32 %v846, %v914
        %v947 = vadd.f32 %v847, %v915
        %v948 = vadd.f32 %v848, %v916
        %v949 = vadd.f32 %v849, %v917
        %v950 = vadd.f32 %v850, %v918
        %v951 = vadd.f32 %v851, %v919
        %v952 = vadd.f32 %v852, %v920
        %v953 = vadd.f32 %v853, %v921
        %v954 = vadd.f32 %v854, %v922
        %v955 = vadd.f32 %v855, %v923
        %v956 = vadd.f32 %v856, %v924
        %v957 = vadd.f32 %v857, %v925
        %v958 = vadd.f32 %v858, %v926
        %v959 = vadd.f32 %v859, %v927
        %v960 = vadd.f32 %v860, %v928
        %v961 = vadd.f32 %v861, %v929
        %v962 = vadd.f32 %v862, %v930
        %v963 = vld [vmem:[#allocation2 + $0x9] sm:$0xff]
        %v964 = vld [vmem:[#allocation2 + $0x11] sm:$0xff]
        %v965 = vld [vmem:[#allocation2 + $0x29] sm:$0xff]
        %v966 = vld [vmem:[#allocation2 + $0x31] sm:$0xff]
        %v967 = vld [vmem:[#allocation2 + $0x49] sm:$0xff]
        %v968 = vld [vmem:[#allocation2 + $0x51] sm:$0xff]
        %v969 = vld [vmem:[#allocation2 + $0x69] sm:$0xff]
        %v970 = vld [vmem:[#allocation2 + $0x71] sm:$0xff]
        %v971 = vld [vmem:[#allocation2 + $0x89] sm:$0xff]
        %v972 = vld [vmem:[#allocation2 + $0x91] sm:$0xff]
        %v973 = vld [vmem:[#allocation2 + $0xa9] sm:$0xff]
        %v974 = vld [vmem:[#allocation2 + $0xb1] sm:$0xff]
        %v975 = vld [vmem:[#allocation2 + $0xc9] sm:$0xff]
        %v976 = vld [vmem:[#allocation2 + $0xd1] sm:$0xff]
        %v977 = vld [vmem:[#allocation2 + $0xe9] sm:$0xff]
        %v978 = vld [vmem:[#allocation2 + $0xf1] sm:$0xff]
        %v979 = vld [vmem:[#allocation2 + $0x109] sm:$0xff]
        %v980 = vld [vmem:[#allocation2 + $0x111] sm:$0xff]
        %v981 = vld [vmem:[#allocation2 + $0x129] sm:$0xff]
        %v982 = vld [vmem:[#allocation2 + $0x131] sm:$0xff]
        %v983 = vld [vmem:[#allocation2 + $0x149] sm:$0xff]
        %v984 = vld [vmem:[#allocation2 + $0x151] sm:$0xff]
        %v985 = vld [vmem:[#allocation2 + $0x169] sm:$0xff]
        %v986 = vld [vmem:[#allocation2 + $0x171] sm:$0xff]
        %v987 = vld [vmem:[#allocation2 + $0x189] sm:$0xff]
        %v988 = vld [vmem:[#allocation2 + $0x191] sm:$0xff]
        %v989 = vld [vmem:[#allocation2 + $0x1a9] sm:$0xff]
        %v990 = vld [vmem:[#allocation2 + $0x1b1] sm:$0xff]
        %v991 = vld [vmem:[#allocation2 + $0x1c9] sm:$0xff]
        %v992 = vld [vmem:[#allocation2 + $0x1d1] sm:$0xff]
        %v993 = vld [vmem:[#allocation2 + $0x1e9] sm:$0xff]
        %v994 = vld [vmem:[#allocation2 + $0x1f1] sm:$0xff]
        %v995 = vlaneseq
        %v996 = vshrl.u32 %v995, 7
        %v997 = vsub.s32 2, %v996
        %v998 = vrot.slane %v760, %v997
        %v999 = vmul.f32 %v963, %v998
        %v1000 = vmul.f32 %v964, %v998
        %v1001 = vmul.f32 %v965, %v998
        %v1002 = vmul.f32 %v966, %v998
        %v1003 = vmul.f32 %v967, %v998
        %v1004 = vmul.f32 %v968, %v998
        %v1005 = vmul.f32 %v969, %v998
        %v1006 = vmul.f32 %v970, %v998
        %v1007 = vmul.f32 %v971, %v998
        %v1008 = vmul.f32 %v972, %v998
        %v1009 = vmul.f32 %v973, %v998
        %v1010 = vmul.f32 %v974, %v998
        %v1011 = vmul.f32 %v975, %v998
        %v1012 = vmul.f32 %v976, %v998
        %v1013 = vmul.f32 %v977, %v998
        %v1014 = vmul.f32 %v978, %v998
        %v1015 = vmul.f32 %v979, %v998
        %v1016 = vmul.f32 %v980, %v998
        %v1017 = vmul.f32 %v981, %v998
        %v1018 = vmul.f32 %v982, %v998
        %v1019 = vmul.f32 %v983, %v998
        %v1020 = vmul.f32 %v984, %v998
        %v1021 = vmul.f32 %v985, %v998
        %v1022 = vmul.f32 %v986, %v998
        %v1023 = vmul.f32 %v987, %v998
        %v1024 = vmul.f32 %v988, %v998
        %v1025 = vmul.f32 %v989, %v998
        %v1026 = vmul.f32 %v990, %v998
        %v1027 = vmul.f32 %v991, %v998
        %v1028 = vmul.f32 %v992, %v998
        %v1029 = vmul.f32 %v993, %v998
        %v1030 = vmul.f32 %v994, %v998
        %v1031 = vadd.f32 %v931, %v999
        %v1032 = vadd.f32 %v932, %v1000
        %v1033 = vadd.f32 %v933, %v1001
        %v1034 = vadd.f32 %v934, %v1002
        %v1035 = vadd.f32 %v935, %v1003
        %v1036 = vadd.f32 %v936, %v1004
        %v1037 = vadd.f32 %v937, %v1005
        %v1038 = vadd.f32 %v938, %v1006
        %v1039 = vadd.f32 %v939, %v1007
        %v1040 = vadd.f32 %v940, %v1008
        %v1041 = vadd.f32 %v941, %v1009
        %v1042 = vadd.f32 %v942, %v1010
        %v1043 = vadd.f32 %v943, %v1011
        %v1044 = vadd.f32 %v944, %v1012
        %v1045 = vadd.f32 %v945, %v1013
        %v1046 = vadd.f32 %v946, %v1014
        %v1047 = vadd.f32 %v947, %v1015
        %v1048 = vadd.f32 %v948, %v1016
        %v1049 = vadd.f32 %v949, %v1017
        %v1050 = vadd.f32 %v950, %v1018
        %v1051 = vadd.f32 %v951, %v1019
        %v1052 = vadd.f32 %v952, %v1020
        %v1053 = vadd.f32 %v953, %v1021
        %v1054 = vadd.f32 %v954, %v1022
        %v1055 = vadd.f32 %v955, %v1023
        %v1056 = vadd.f32 %v956, %v1024
        %v1057 = vadd.f32 %v957, %v1025
        %v1058 = vadd.f32 %v958, %v1026
        %v1059 = vadd.f32 %v959, %v1027
        %v1060 = vadd.f32 %v960, %v1028
        %v1061 = vadd.f32 %v961, %v1029
        %v1062 = vadd.f32 %v962, %v1030
        %v1063 = vld [vmem:[%s686 + $0x7] sm:$0xff]
        %v1064 = vld [vmem:[%s686 + $0xf] sm:$0xff]
        %v1065 = vld [vmem:[%s686 + $0x27] sm:$0xff]
        %v1066 = vld [vmem:[%s686 + $0x2f] sm:$0xff]
        %v1067 = vld [vmem:[%s686 + $0x47] sm:$0xff]
        %v1068 = vld [vmem:[%s686 + $0x4f] sm:$0xff]
        %v1069 = vld [vmem:[%s686 + $0x67] sm:$0xff]
        %v1070 = vld [vmem:[%s686 + $0x6f] sm:$0xff]
        %v1071 = vld [vmem:[%s686 + $0x87] sm:$0xff]
        %v1072 = vld [vmem:[%s686 + $0x8f] sm:$0xff]
        %v1073 = vld [vmem:[%s686 + $0xa7] sm:$0xff]
        %v1074 = vld [vmem:[%s686 + $0xaf] sm:$0xff]
        %v1075 = vld [vmem:[%s686 + $0xc7] sm:$0xff]
        %v1076 = vld [vmem:[%s686 + $0xcf] sm:$0xff]
        %v1077 = vld [vmem:[%s686 + $0xe7] sm:$0xff]
        %v1078 = vld [vmem:[%s686 + $0xef] sm:$0xff]
        %v1079 = vld [vmem:[%s686 + $0x107] sm:$0xff]
        %v1080 = vld [vmem:[%s686 + $0x10f] sm:$0xff]
        %v1081 = vld [vmem:[%s686 + $0x127] sm:$0xff]
        %v1082 = vld [vmem:[%s686 + $0x12f] sm:$0xff]
        %v1083 = vld [vmem:[%s686 + $0x147] sm:$0xff]
        %v1084 = vld [vmem:[%s686 + $0x14f] sm:$0xff]
        %v1085 = vld [vmem:[%s686 + $0x167] sm:$0xff]
        %v1086 = vld [vmem:[%s686 + $0x16f] sm:$0xff]
        %v1087 = vld [vmem:[%s686 + $0x187] sm:$0xff]
        %v1088 = vld [vmem:[%s686 + $0x18f] sm:$0xff]
        %v1089 = vld [vmem:[%s686 + $0x1a7] sm:$0xff]
        %v1090 = vld [vmem:[%s686 + $0x1af] sm:$0xff]
        %v1091 = vld [vmem:[%s686 + $0x1c7] sm:$0xff]
        %v1092 = vld [vmem:[%s686 + $0x1cf] sm:$0xff]
        %v1093 = vld [vmem:[%s686 + $0x1e7] sm:$0xff]
        %v1094 = vld [vmem:[%s686 + $0x1ef] sm:$0xff]
        %v1095 = vlaneseq
        %v1096 = vshrl.u32 %v1095, 7
        %v1097 = vsub.s32 0, %v1096
        %v1098 = vrot.slane %v761, %v1097
        %v1099 = vmul.f32 %v1063, %v1098
        %v1100 = vmul.f32 %v1064, %v1098
        %v1101 = vmul.f32 %v1065, %v1098
        %v1102 = vmul.f32 %v1066, %v1098
        %v1103 = vmul.f32 %v1067, %v1098
        %v1104 = vmul.f32 %v1068, %v1098
        %v1105 = vmul.f32 %v1069, %v1098
        %v1106 = vmul.f32 %v1070, %v1098
        %v1107 = vmul.f32 %v1071, %v1098
        %v1108 = vmul.f32 %v1072, %v1098
        %v1109 = vmul.f32 %v1073, %v1098
        %v1110 = vmul.f32 %v1074, %v1098
        %v1111 = vmul.f32 %v1075, %v1098
        %v1112 = vmul.f32 %v1076, %v1098
        %v1113 = vmul.f32 %v1077, %v1098
        %v1114 = vmul.f32 %v1078, %v1098
        %v1115 = vmul.f32 %v1079, %v1098
        %v1116 = vmul.f32 %v1080, %v1098
        %v1117 = vmul.f32 %v1081, %v1098
        %v1118 = vmul.f32 %v1082, %v1098
        %v1119 = vmul.f32 %v1083, %v1098
        %v1120 = vmul.f32 %v1084, %v1098
        %v1121 = vmul.f32 %v1085, %v1098
        %v1122 = vmul.f32 %v1086, %v1098
        %v1123 = vmul.f32 %v1087, %v1098
        %v1124 = vmul.f32 %v1088, %v1098
        %v1125 = vmul.f32 %v1089, %v1098
        %v1126 = vmul.f32 %v1090, %v1098
        %v1127 = vmul.f32 %v1091, %v1098
        %v1128 = vmul.f32 %v1092, %v1098
        %v1129 = vmul.f32 %v1093, %v1098
        %v1130 = vmul.f32 %v1094, %v1098
        %v1131 = vadd.f32 %v1031, %v1099
        %v1132 = vadd.f32 %v1032, %v1100
        %v1133 = vadd.f32 %v1033, %v1101
        %v1134 = vadd.f32 %v1034, %v1102
        %v1135 = vadd.f32 %v1035, %v1103
        %v1136 = vadd.f32 %v1036, %v1104
        %v1137 = vadd.f32 %v1037, %v1105
        %v1138 = vadd.f32 %v1038, %v1106
        %v1139 = vadd.f32 %v1039, %v1107
        %v1140 = vadd.f32 %v1040, %v1108
        %v1141 = vadd.f32 %v1041, %v1109
        %v1142 = vadd.f32 %v1042, %v1110
        %v1143 = vadd.f32 %v1043, %v1111
        %v1144 = vadd.f32 %v1044, %v1112
        %v1145 = vadd.f32 %v1045, %v1113
        %v1146 = vadd.f32 %v1046, %v1114
        %v1147 = vadd.f32 %v1047, %v1115
        %v1148 = vadd.f32 %v1048, %v1116
        %v1149 = vadd.f32 %v1049, %v1117
        %v1150 = vadd.f32 %v1050, %v1118
        %v1151 = vadd.f32 %v1051, %v1119
        %v1152 = vadd.f32 %v1052, %v1120
        %v1153 = vadd.f32 %v1053, %v1121
        %v1154 = vadd.f32 %v1054, %v1122
        %v1155 = vadd.f32 %v1055, %v1123
        %v1156 = vadd.f32 %v1056, %v1124
        %v1157 = vadd.f32 %v1057, %v1125
        %v1158 = vadd.f32 %v1058, %v1126
        %v1159 = vadd.f32 %v1059, %v1127
        %v1160 = vadd.f32 %v1060, %v1128
        %v1161 = vadd.f32 %v1061, %v1129
        %v1162 = vadd.f32 %v1062, %v1130
        %v1163 = vld [vmem:[%s686 + $0x8] sm:$0xff]
        %v1164 = vld [vmem:[%s686 + $0x10] sm:$0xff]
        %v1165 = vld [vmem:[%s686 + $0x28] sm:$0xff]
        %v1166 = vld [vmem:[%s686 + $0x30] sm:$0xff]
        %v1167 = vld [vmem:[%s686 + $0x48] sm:$0xff]
        %v1168 = vld [vmem:[%s686 + $0x50] sm:$0xff]
        %v1169 = vld [vmem:[%s686 + $0x68] sm:$0xff]
        %v1170 = vld [vmem:[%s686 + $0x70] sm:$0xff]
        %v1171 = vld [vmem:[%s686 + $0x88] sm:$0xff]
        %v1172 = vld [vmem:[%s686 + $0x90] sm:$0xff]
        %v1173 = vld [vmem:[%s686 + $0xa8] sm:$0xff]
        %v1174 = vld [vmem:[%s686 + $0xb0] sm:$0xff]
        %v1175 = vld [vmem:[%s686 + $0xc8] sm:$0xff]
        %v1176 = vld [vmem:[%s686 + $0xd0] sm:$0xff]
        %v1177 = vld [vmem:[%s686 + $0xe8] sm:$0xff]
        %v1178 = vld [vmem:[%s686 + $0xf0] sm:$0xff]
        %v1179 = vld [vmem:[%s686 + $0x108] sm:$0xff]
        %v1180 = vld [vmem:[%s686 + $0x110] sm:$0xff]
        %v1181 = vld [vmem:[%s686 + $0x128] sm:$0xff]
        %v1182 = vld [vmem:[%s686 + $0x130] sm:$0xff]
        %v1183 = vld [vmem:[%s686 + $0x148] sm:$0xff]
        %v1184 = vld [vmem:[%s686 + $0x150] sm:$0xff]
        %v1185 = vld [vmem:[%s686 + $0x168] sm:$0xff]
        %v1186 = vld [vmem:[%s686 + $0x170] sm:$0xff]
        %v1187 = vld [vmem:[%s686 + $0x188] sm:$0xff]
        %v1188 = vld [vmem:[%s686 + $0x190] sm:$0xff]
        %v1189 = vld [vmem:[%s686 + $0x1a8] sm:$0xff]
        %v1190 = vld [vmem:[%s686 + $0x1b0] sm:$0xff]
        %v1191 = vld [vmem:[%s686 + $0x1c8] sm:$0xff]
        %v1192 = vld [vmem:[%s686 + $0x1d0] sm:$0xff]
        %v1193 = vld [vmem:[%s686 + $0x1e8] sm:$0xff]
        %v1194 = vld [vmem:[%s686 + $0x1f0] sm:$0xff]
        %v1195 = vlaneseq
        %v1196 = vshrl.u32 %v1195, 7
        %v1197 = vsub.s32 1, %v1196
        %v1198 = vrot.slane %v761, %v1197
        %v1199 = vmul.f32 %v1163, %v1198
        %v1200 = vmul.f32 %v1164, %v1198
        %v1201 = vmul.f32 %v1165, %v1198
        %v1202 = vmul.f32 %v1166, %v1198
        %v1203 = vmul.f32 %v1167, %v1198
        %v1204 = vmul.f32 %v1168, %v1198
        %v1205 = vmul.f32 %v1169, %v1198
        %v1206 = vmul.f32 %v1170, %v1198
        %v1207 = vmul.f32 %v1171, %v1198
        %v1208 = vmul.f32 %v1172, %v1198
        %v1209 = vmul.f32 %v1173, %v1198
        %v1210 = vmul.f32 %v1174, %v1198
        %v1211 = vmul.f32 %v1175, %v1198
        %v1212 = vmul.f32 %v1176, %v1198
        %v1213 = vmul.f32 %v1177, %v1198
        %v1214 = vmul.f32 %v1178, %v1198
        %v1215 = vmul.f32 %v1179, %v1198
        %v1216 = vmul.f32 %v1180, %v1198
        %v1217 = vmul.f32 %v1181, %v1198
        %v1218 = vmul.f32 %v1182, %v1198
        %v1219 = vmul.f32 %v1183, %v1198
        %v1220 = vmul.f32 %v1184, %v1198
        %v1221 = vmul.f32 %v1185, %v1198
        %v1222 = vmul.f32 %v1186, %v1198
        %v1223 = vmul.f32 %v1187, %v1198
        %v1224 = vmul.f32 %v1188, %v1198
        %v1225 = vmul.f32 %v1189, %v1198
        %v1226 = vmul.f32 %v1190, %v1198
        %v1227 = vmul.f32 %v1191, %v1198
        %v1228 = vmul.f32 %v1192, %v1198
        %v1229 = vmul.f32 %v1193, %v1198
        %v1230 = vmul.f32 %v1194, %v1198
        %v1231 = vadd.f32 %v1131, %v1199
        %v1232 = vadd.f32 %v1132, %v1200
        %v1233 = vadd.f32 %v1133, %v1201
        %v1234 = vadd.f32 %v1134, %v1202
        %v1235 = vadd.f32 %v1135, %v1203
        %v1236 = vadd.f32 %v1136, %v1204
        %v1237 = vadd.f32 %v1137, %v1205
        %v1238 = vadd.f32 %v1138, %v1206
        %v1239 = vadd.f32 %v1139, %v1207
        %v1240 = vadd.f32 %v1140, %v1208
        %v1241 = vadd.f32 %v1141, %v1209
        %v1242 = vadd.f32 %v1142, %v1210
        %v1243 = vadd.f32 %v1143, %v1211
        %v1244 = vadd.f32 %v1144, %v1212
        %v1245 = vadd.f32 %v1145, %v1213
        %v1246 = vadd.f32 %v1146, %v1214
        %v1247 = vadd.f32 %v1147, %v1215
        %v1248 = vadd.f32 %v1148, %v1216
        %v1249 = vadd.f32 %v1149, %v1217
        %v1250 = vadd.f32 %v1150, %v1218
        %v1251 = vadd.f32 %v1151, %v1219
        %v1252 = vadd.f32 %v1152, %v1220
        %v1253 = vadd.f32 %v1153, %v1221
        %v1254 = vadd.f32 %v1154, %v1222
        %v1255 = vadd.f32 %v1155, %v1223
        %v1256 = vadd.f32 %v1156, %v1224
        %v1257 = vadd.f32 %v1157, %v1225
        %v1258 = vadd.f32 %v1158, %v1226
        %v1259 = vadd.f32 %v1159, %v1227
        %v1260 = vadd.f32 %v1160, %v1228
        %v1261 = vadd.f32 %v1161, %v1229
        %v1262 = vadd.f32 %v1162, %v1230
        %v1263 = vld [vmem:[%s686 + $0x9] sm:$0xff]
        %v1264 = vld [vmem:[%s686 + $0x11] sm:$0xff]
        %v1265 = vld [vmem:[%s686 + $0x29] sm:$0xff]
        %v1266 = vld [vmem:[%s686 + $0x31] sm:$0xff]
        %v1267 = vld [vmem:[%s686 + $0x49] sm:$0xff]
        %v1268 = vld [vmem:[%s686 + $0x51] sm:$0xff]
        %v1269 = vld [vmem:[%s686 + $0x69] sm:$0xff]
        %v1270 = vld [vmem:[%s686 + $0x71] sm:$0xff]
        %v1271 = vld [vmem:[%s686 + $0x89] sm:$0xff]
        %v1272 = vld [vmem:[%s686 + $0x91] sm:$0xff]
        %v1273 = vld [vmem:[%s686 + $0xa9] sm:$0xff]
        %v1274 = vld [vmem:[%s686 + $0xb1] sm:$0xff]
        %v1275 = vld [vmem:[%s686 + $0xc9] sm:$0xff]
        %v1276 = vld [vmem:[%s686 + $0xd1] sm:$0xff]
        %v1277 = vld [vmem:[%s686 + $0xe9] sm:$0xff]
        %v1278 = vld [vmem:[%s686 + $0xf1] sm:$0xff]
        %v1279 = vld [vmem:[%s686 + $0x109] sm:$0xff]
        %v1280 = vld [vmem:[%s686 + $0x111] sm:$0xff]
        %v1281 = vld [vmem:[%s686 + $0x129] sm:$0xff]
        %v1282 = vld [vmem:[%s686 + $0x131] sm:$0xff]
        %v1283 = vld [vmem:[%s686 + $0x149] sm:$0xff]
        %v1284 = vld [vmem:[%s686 + $0x151] sm:$0xff]
        %v1285 = vld [vmem:[%s686 + $0x169] sm:$0xff]
        %v1286 = vld [vmem:[%s686 + $0x171] sm:$0xff]
        %v1287 = vld [vmem:[%s686 + $0x189] sm:$0xff]
        %v1288 = vld [vmem:[%s686 + $0x191] sm:$0xff]
        %v1289 = vld [vmem:[%s686 + $0x1a9] sm:$0xff]
        %v1290 = vld [vmem:[%s686 + $0x1b1] sm:$0xff]
        %v1291 = vld [vmem:[%s686 + $0x1c9] sm:$0xff]
        %v1292 = vld [vmem:[%s686 + $0x1d1] sm:$0xff]
        %v1293 = vld [vmem:[%s686 + $0x1e9] sm:$0xff]
        %v1294 = vld [vmem:[%s686 + $0x1f1] sm:$0xff]
        %v1295 = vlaneseq
        %v1296 = vshrl.u32 %v1295, 7
        %v1297 = vsub.s32 2, %v1296
        %v1298 = vrot.slane %v761, %v1297
        %v1299 = vmul.f32 %v1263, %v1298
        %v1300 = vmul.f32 %v1264, %v1298
        %v1301 = vmul.f32 %v1265, %v1298
        %v1302 = vmul.f32 %v1266, %v1298
        %v1303 = vmul.f32 %v1267, %v1298
        %v1304 = vmul.f32 %v1268, %v1298
        %v1305 = vmul.f32 %v1269, %v1298
        %v1306 = vmul.f32 %v1270, %v1298
        %v1307 = vmul.f32 %v1271, %v1298
        %v1308 = vmul.f32 %v1272, %v1298
        %v1309 = vmul.f32 %v1273, %v1298
        %v1310 = vmul.f32 %v1274, %v1298
        %v1311 = vmul.f32 %v1275, %v1298
        %v1312 = vmul.f32 %v1276, %v1298
        %v1313 = vmul.f32 %v1277, %v1298
        %v1314 = vmul.f32 %v1278, %v1298
        %v1315 = vmul.f32 %v1279, %v1298
        %v1316 = vmul.f32 %v1280, %v1298
        %v1317 = vmul.f32 %v1281, %v1298
        %v1318 = vmul.f32 %v1282, %v1298
        %v1319 = vmul.f32 %v1283, %v1298
        %v1320 = vmul.f32 %v1284, %v1298
        %v1321 = vmul.f32 %v1285, %v1298
        %v1322 = vmul.f32 %v1286, %v1298
        %v1323 = vmul.f32 %v1287, %v1298
        %v1324 = vmul.f32 %v1288, %v1298
        %v1325 = vmul.f32 %v1289, %v1298
        %v1326 = vmul.f32 %v1290, %v1298
        %v1327 = vmul.f32 %v1291, %v1298
        %v1328 = vmul.f32 %v1292, %v1298
        %v1329 = vmul.f32 %v1293, %v1298
        %v1330 = vmul.f32 %v1294, %v1298
        %v1331 = vadd.f32 %v1231, %v1299
        %v1332 = vadd.f32 %v1232, %v1300
        %v1333 = vadd.f32 %v1233, %v1301
        %v1334 = vadd.f32 %v1234, %v1302
        %v1335 = vadd.f32 %v1235, %v1303
        %v1336 = vadd.f32 %v1236, %v1304
        %v1337 = vadd.f32 %v1237, %v1305
        %v1338 = vadd.f32 %v1238, %v1306
        %v1339 = vadd.f32 %v1239, %v1307
        %v1340 = vadd.f32 %v1240, %v1308
        %v1341 = vadd.f32 %v1241, %v1309
        %v1342 = vadd.f32 %v1242, %v1310
        %v1343 = vadd.f32 %v1243, %v1311
        %v1344 = vadd.f32 %v1244, %v1312
        %v1345 = vadd.f32 %v1245, %v1313
        %v1346 = vadd.f32 %v1246, %v1314
        %v1347 = vadd.f32 %v1247, %v1315
        %v1348 = vadd.f32 %v1248, %v1316
        %v1349 = vadd.f32 %v1249, %v1317
        %v1350 = vadd.f32 %v1250, %v1318
        %v1351 = vadd.f32 %v1251, %v1319
        %v1352 = vadd.f32 %v1252, %v1320
        %v1353 = vadd.f32 %v1253, %v1321
        %v1354 = vadd.f32 %v1254, %v1322
        %v1355 = vadd.f32 %v1255, %v1323
        %v1356 = vadd.f32 %v1256, %v1324
        %v1357 = vadd.f32 %v1257, %v1325
        %v1358 = vadd.f32 %v1258, %v1326
        %v1359 = vadd.f32 %v1259, %v1327
        %v1360 = vadd.f32 %v1260, %v1328
        %v1361 = vadd.f32 %v1261, %v1329
        %v1362 = vadd.f32 %v1262, %v1330
        %s1363 = scalar_lea.vmem [#allocation2], 64
        %v1364 = vld [vmem:[%s1363 + $0x7] sm:$0xff]
        %v1365 = vld [vmem:[%s1363 + $0xf] sm:$0xff]
        %v1366 = vld [vmem:[%s1363 + $0x27] sm:$0xff]
        %v1367 = vld [vmem:[%s1363 + $0x2f] sm:$0xff]
        %v1368 = vld [vmem:[%s1363 + $0x47] sm:$0xff]
        %v1369 = vld [vmem:[%s1363 + $0x4f] sm:$0xff]
        %v1370 = vld [vmem:[%s1363 + $0x67] sm:$0xff]
        %v1371 = vld [vmem:[%s1363 + $0x6f] sm:$0xff]
        %v1372 = vld [vmem:[%s1363 + $0x87] sm:$0xff]
        %v1373 = vld [vmem:[%s1363 + $0x8f] sm:$0xff]
        %v1374 = vld [vmem:[%s1363 + $0xa7] sm:$0xff]
        %v1375 = vld [vmem:[%s1363 + $0xaf] sm:$0xff]
        %v1376 = vld [vmem:[%s1363 + $0xc7] sm:$0xff]
        %v1377 = vld [vmem:[%s1363 + $0xcf] sm:$0xff]
        %v1378 = vld [vmem:[%s1363 + $0xe7] sm:$0xff]
        %v1379 = vld [vmem:[%s1363 + $0xef] sm:$0xff]
        %v1380 = vld [vmem:[%s1363 + $0x107] sm:$0xff]
        %v1381 = vld [vmem:[%s1363 + $0x10f] sm:$0xff]
        %v1382 = vld [vmem:[%s1363 + $0x127] sm:$0xff]
        %v1383 = vld [vmem:[%s1363 + $0x12f] sm:$0xff]
        %v1384 = vld [vmem:[%s1363 + $0x147] sm:$0xff]
        %v1385 = vld [vmem:[%s1363 + $0x14f] sm:$0xff]
        %v1386 = vld [vmem:[%s1363 + $0x167] sm:$0xff]
        %v1387 = vld [vmem:[%s1363 + $0x16f] sm:$0xff]
        %v1388 = vld [vmem:[%s1363 + $0x187] sm:$0xff]
        %v1389 = vld [vmem:[%s1363 + $0x18f] sm:$0xff]
        %v1390 = vld [vmem:[%s1363 + $0x1a7] sm:$0xff]
        %v1391 = vld [vmem:[%s1363 + $0x1af] sm:$0xff]
        %v1392 = vld [vmem:[%s1363 + $0x1c7] sm:$0xff]
        %v1393 = vld [vmem:[%s1363 + $0x1cf] sm:$0xff]
        %v1394 = vld [vmem:[%s1363 + $0x1e7] sm:$0xff]
        %v1395 = vld [vmem:[%s1363 + $0x1ef] sm:$0xff]
        %v1396 = vlaneseq
        %v1397 = vshrl.u32 %v1396, 7
        %v1398 = vsub.s32 0, %v1397
        %v1399 = vrot.slane %v762, %v1398
        %v1400 = vmul.f32 %v1364, %v1399
        %v1401 = vmul.f32 %v1365, %v1399
        %v1402 = vmul.f32 %v1366, %v1399
        %v1403 = vmul.f32 %v1367, %v1399
        %v1404 = vmul.f32 %v1368, %v1399
        %v1405 = vmul.f32 %v1369, %v1399
        %v1406 = vmul.f32 %v1370, %v1399
        %v1407 = vmul.f32 %v1371, %v1399
        %v1408 = vmul.f32 %v1372, %v1399
        %v1409 = vmul.f32 %v1373, %v1399
        %v1410 = vmul.f32 %v1374, %v1399
        %v1411 = vmul.f32 %v1375, %v1399
        %v1412 = vmul.f32 %v1376, %v1399
        %v1413 = vmul.f32 %v1377, %v1399
        %v1414 = vmul.f32 %v1378, %v1399
        %v1415 = vmul.f32 %v1379, %v1399
        %v1416 = vmul.f32 %v1380, %v1399
        %v1417 = vmul.f32 %v1381, %v1399
        %v1418 = vmul.f32 %v1382, %v1399
        %v1419 = vmul.f32 %v1383, %v1399
        %v1420 = vmul.f32 %v1384, %v1399
        %v1421 = vmul.f32 %v1385, %v1399
        %v1422 = vmul.f32 %v1386, %v1399
        %v1423 = vmul.f32 %v1387, %v1399
        %v1424 = vmul.f32 %v1388, %v1399
        %v1425 = vmul.f32 %v1389, %v1399
        %v1426 = vmul.f32 %v1390, %v1399
        %v1427 = vmul.f32 %v1391, %v1399
        %v1428 = vmul.f32 %v1392, %v1399
        %v1429 = vmul.f32 %v1393, %v1399
        %v1430 = vmul.f32 %v1394, %v1399
        %v1431 = vmul.f32 %v1395, %v1399
        %v1432 = vadd.f32 %v1331, %v1400
        %v1433 = vadd.f32 %v1332, %v1401
        %v1434 = vadd.f32 %v1333, %v1402
        %v1435 = vadd.f32 %v1334, %v1403
        %v1436 = vadd.f32 %v1335, %v1404
        %v1437 = vadd.f32 %v1336, %v1405
        %v1438 = vadd.f32 %v1337, %v1406
        %v1439 = vadd.f32 %v1338, %v1407
        %v1440 = vadd.f32 %v1339, %v1408
        %v1441 = vadd.f32 %v1340, %v1409
        %v1442 = vadd.f32 %v1341, %v1410
        %v1443 = vadd.f32 %v1342, %v1411
        %v1444 = vadd.f32 %v1343, %v1412
        %v1445 = vadd.f32 %v1344, %v1413
        %v1446 = vadd.f32 %v1345, %v1414
        %v1447 = vadd.f32 %v1346, %v1415
        %v1448 = vadd.f32 %v1347, %v1416
        %v1449 = vadd.f32 %v1348, %v1417
        %v1450 = vadd.f32 %v1349, %v1418
        %v1451 = vadd.f32 %v1350, %v1419
        %v1452 = vadd.f32 %v1351, %v1420
        %v1453 = vadd.f32 %v1352, %v1421
        %v1454 = vadd.f32 %v1353, %v1422
        %v1455 = vadd.f32 %v1354, %v1423
        %v1456 = vadd.f32 %v1355, %v1424
        %v1457 = vadd.f32 %v1356, %v1425
        %v1458 = vadd.f32 %v1357, %v1426
        %v1459 = vadd.f32 %v1358, %v1427
        %v1460 = vadd.f32 %v1359, %v1428
        %v1461 = vadd.f32 %v1360, %v1429
        %v1462 = vadd.f32 %v1361, %v1430
        %v1463 = vadd.f32 %v1362, %v1431
        %v1464 = vld [vmem:[%s1363 + $0x8] sm:$0xff]
        %v1465 = vld [vmem:[%s1363 + $0x10] sm:$0xff]
        %v1466 = vld [vmem:[%s1363 + $0x28] sm:$0xff]
        %v1467 = vld [vmem:[%s1363 + $0x30] sm:$0xff]
        %v1468 = vld [vmem:[%s1363 + $0x48] sm:$0xff]
        %v1469 = vld [vmem:[%s1363 + $0x50] sm:$0xff]
        %v1470 = vld [vmem:[%s1363 + $0x68] sm:$0xff]
        %v1471 = vld [vmem:[%s1363 + $0x70] sm:$0xff]
        %v1472 = vld [vmem:[%s1363 + $0x88] sm:$0xff]
        %v1473 = vld [vmem:[%s1363 + $0x90] sm:$0xff]
        %v1474 = vld [vmem:[%s1363 + $0xa8] sm:$0xff]
        %v1475 = vld [vmem:[%s1363 + $0xb0] sm:$0xff]
        %v1476 = vld [vmem:[%s1363 + $0xc8] sm:$0xff]
        %v1477 = vld [vmem:[%s1363 + $0xd0] sm:$0xff]
        %v1478 = vld [vmem:[%s1363 + $0xe8] sm:$0xff]
        %v1479 = vld [vmem:[%s1363 + $0xf0] sm:$0xff]
        %v1480 = vld [vmem:[%s1363 + $0x108] sm:$0xff]
        %v1481 = vld [vmem:[%s1363 + $0x110] sm:$0xff]
        %v1482 = vld [vmem:[%s1363 + $0x128] sm:$0xff]
        %v1483 = vld [vmem:[%s1363 + $0x130] sm:$0xff]
        %v1484 = vld [vmem:[%s1363 + $0x148] sm:$0xff]
        %v1485 = vld [vmem:[%s1363 + $0x150] sm:$0xff]
        %v1486 = vld [vmem:[%s1363 + $0x168] sm:$0xff]
        %v1487 = vld [vmem:[%s1363 + $0x170] sm:$0xff]
        %v1488 = vld [vmem:[%s1363 + $0x188] sm:$0xff]
        %v1489 = vld [vmem:[%s1363 + $0x190] sm:$0xff]
        %v1490 = vld [vmem:[%s1363 + $0x1a8] sm:$0xff]
        %v1491 = vld [vmem:[%s1363 + $0x1b0] sm:$0xff]
        %v1492 = vld [vmem:[%s1363 + $0x1c8] sm:$0xff]
        %v1493 = vld [vmem:[%s1363 + $0x1d0] sm:$0xff]
        %v1494 = vld [vmem:[%s1363 + $0x1e8] sm:$0xff]
        %v1495 = vld [vmem:[%s1363 + $0x1f0] sm:$0xff]
        %v1496 = vlaneseq
        %v1497 = vshrl.u32 %v1496, 7
        %v1498 = vsub.s32 1, %v1497
        %v1499 = vrot.slane %v762, %v1498
        %v1500 = vmul.f32 %v1464, %v1499
        %v1501 = vmul.f32 %v1465, %v1499
        %v1502 = vmul.f32 %v1466, %v1499
        %v1503 = vmul.f32 %v1467, %v1499
        %v1504 = vmul.f32 %v1468, %v1499
        %v1505 = vmul.f32 %v1469, %v1499
        %v1506 = vmul.f32 %v1470, %v1499
        %v1507 = vmul.f32 %v1471, %v1499
        %v1508 = vmul.f32 %v1472, %v1499
        %v1509 = vmul.f32 %v1473, %v1499
        %v1510 = vmul.f32 %v1474, %v1499
        %v1511 = vmul.f32 %v1475, %v1499
        %v1512 = vmul.f32 %v1476, %v1499
        %v1513 = vmul.f32 %v1477, %v1499
        %v1514 = vmul.f32 %v1478, %v1499
        %v1515 = vmul.f32 %v1479, %v1499
        %v1516 = vmul.f32 %v1480, %v1499
        %v1517 = vmul.f32 %v1481, %v1499
        %v1518 = vmul.f32 %v1482, %v1499
        %v1519 = vmul.f32 %v1483, %v1499
        %v1520 = vmul.f32 %v1484, %v1499
        %v1521 = vmul.f32 %v1485, %v1499
        %v1522 = vmul.f32 %v1486, %v1499
        %v1523 = vmul.f32 %v1487, %v1499
        %v1524 = vmul.f32 %v1488, %v1499
        %v1525 = vmul.f32 %v1489, %v1499
        %v1526 = vmul.f32 %v1490, %v1499
        %v1527 = vmul.f32 %v1491, %v1499
        %v1528 = vmul.f32 %v1492, %v1499
        %v1529 = vmul.f32 %v1493, %v1499
        %v1530 = vmul.f32 %v1494, %v1499
        %v1531 = vmul.f32 %v1495, %v1499
        %v1532 = vadd.f32 %v1432, %v1500
        %v1533 = vadd.f32 %v1433, %v1501
        %v1534 = vadd.f32 %v1434, %v1502
        %v1535 = vadd.f32 %v1435, %v1503
        %v1536 = vadd.f32 %v1436, %v1504
        %v1537 = vadd.f32 %v1437, %v1505
        %v1538 = vadd.f32 %v1438, %v1506
        %v1539 = vadd.f32 %v1439, %v1507
        %v1540 = vadd.f32 %v1440, %v1508
        %v1541 = vadd.f32 %v1441, %v1509
        %v1542 = vadd.f32 %v1442, %v1510
        %v1543 = vadd.f32 %v1443, %v1511
        %v1544 = vadd.f32 %v1444, %v1512
        %v1545 = vadd.f32 %v1445, %v1513
        %v1546 = vadd.f32 %v1446, %v1514
        %v1547 = vadd.f32 %v1447, %v1515
        %v1548 = vadd.f32 %v1448, %v1516
        %v1549 = vadd.f32 %v1449, %v1517
        %v1550 = vadd.f32 %v1450, %v1518
        %v1551 = vadd.f32 %v1451, %v1519
        %v1552 = vadd.f32 %v1452, %v1520
        %v1553 = vadd.f32 %v1453, %v1521
        %v1554 = vadd.f32 %v1454, %v1522
        %v1555 = vadd.f32 %v1455, %v1523
        %v1556 = vadd.f32 %v1456, %v1524
        %v1557 = vadd.f32 %v1457, %v1525
        %v1558 = vadd.f32 %v1458, %v1526
        %v1559 = vadd.f32 %v1459, %v1527
        %v1560 = vadd.f32 %v1460, %v1528
        %v1561 = vadd.f32 %v1461, %v1529
        %v1562 = vadd.f32 %v1462, %v1530
        %v1563 = vadd.f32 %v1463, %v1531
        %v1564 = vld [vmem:[%s1363 + $0x9] sm:$0xff]
        %v1565 = vld [vmem:[%s1363 + $0x11] sm:$0xff]
        %v1566 = vld [vmem:[%s1363 + $0x29] sm:$0xff]
        %v1567 = vld [vmem:[%s1363 + $0x31] sm:$0xff]
        %v1568 = vld [vmem:[%s1363 + $0x49] sm:$0xff]
        %v1569 = vld [vmem:[%s1363 + $0x51] sm:$0xff]
        %v1570 = vld [vmem:[%s1363 + $0x69] sm:$0xff]
        %v1571 = vld [vmem:[%s1363 + $0x71] sm:$0xff]
        %v1572 = vld [vmem:[%s1363 + $0x89] sm:$0xff]
        %v1573 = vld [vmem:[%s1363 + $0x91] sm:$0xff]
        %v1574 = vld [vmem:[%s1363 + $0xa9] sm:$0xff]
        %v1575 = vld [vmem:[%s1363 + $0xb1] sm:$0xff]
        %v1576 = vld [vmem:[%s1363 + $0xc9] sm:$0xff]
        %v1577 = vld [vmem:[%s1363 + $0xd1] sm:$0xff]
        %v1578 = vld [vmem:[%s1363 + $0xe9] sm:$0xff]
        %v1579 = vld [vmem:[%s1363 + $0xf1] sm:$0xff]
        %v1580 = vld [vmem:[%s1363 + $0x109] sm:$0xff]
        %v1581 = vld [vmem:[%s1363 + $0x111] sm:$0xff]
        %v1582 = vld [vmem:[%s1363 + $0x129] sm:$0xff]
        %v1583 = vld [vmem:[%s1363 + $0x131] sm:$0xff]
        %v1584 = vld [vmem:[%s1363 + $0x149] sm:$0xff]
        %v1585 = vld [vmem:[%s1363 + $0x151] sm:$0xff]
        %v1586 = vld [vmem:[%s1363 + $0x169] sm:$0xff]
        %v1587 = vld [vmem:[%s1363 + $0x171] sm:$0xff]
        %v1588 = vld [vmem:[%s1363 + $0x189] sm:$0xff]
        %v1589 = vld [vmem:[%s1363 + $0x191] sm:$0xff]
        %v1590 = vld [vmem:[%s1363 + $0x1a9] sm:$0xff]
        %v1591 = vld [vmem:[%s1363 + $0x1b1] sm:$0xff]
        %v1592 = vld [vmem:[%s1363 + $0x1c9] sm:$0xff]
        %v1593 = vld [vmem:[%s1363 + $0x1d1] sm:$0xff]
        %v1594 = vld [vmem:[%s1363 + $0x1e9] sm:$0xff]
        %v1595 = vld [vmem:[%s1363 + $0x1f1] sm:$0xff]
        %v1596 = vlaneseq
        %v1597 = vshrl.u32 %v1596, 7
        %v1598 = vsub.s32 2, %v1597
        %v1599 = vrot.slane %v762, %v1598
        %v1600 = vmul.f32 %v1564, %v1599
        %v1601 = vmul.f32 %v1565, %v1599
        %v1602 = vmul.f32 %v1566, %v1599
        %v1603 = vmul.f32 %v1567, %v1599
        %v1604 = vmul.f32 %v1568, %v1599
        %v1605 = vmul.f32 %v1569, %v1599
        %v1606 = vmul.f32 %v1570, %v1599
        %v1607 = vmul.f32 %v1571, %v1599
        %v1608 = vmul.f32 %v1572, %v1599
        %v1609 = vmul.f32 %v1573, %v1599
        %v1610 = vmul.f32 %v1574, %v1599
        %v1611 = vmul.f32 %v1575, %v1599
        %v1612 = vmul.f32 %v1576, %v1599
        %v1613 = vmul.f32 %v1577, %v1599
        %v1614 = vmul.f32 %v1578, %v1599
        %v1615 = vmul.f32 %v1579, %v1599
        %v1616 = vmul.f32 %v1580, %v1599
        %v1617 = vmul.f32 %v1581, %v1599
        %v1618 = vmul.f32 %v1582, %v1599
        %v1619 = vmul.f32 %v1583, %v1599
        %v1620 = vmul.f32 %v1584, %v1599
        %v1621 = vmul.f32 %v1585, %v1599
        %v1622 = vmul.f32 %v1586, %v1599
        %v1623 = vmul.f32 %v1587, %v1599
        %v1624 = vmul.f32 %v1588, %v1599
        %v1625 = vmul.f32 %v1589, %v1599
        %v1626 = vmul.f32 %v1590, %v1599
        %v1627 = vmul.f32 %v1591, %v1599
        %v1628 = vmul.f32 %v1592, %v1599
        %v1629 = vmul.f32 %v1593, %v1599
        %v1630 = vmul.f32 %v1594, %v1599
        %v1631 = vmul.f32 %v1595, %v1599
        %v1632 = vadd.f32 %v1532, %v1600
        %v1633 = vadd.f32 %v1533, %v1601
        %v1634 = vadd.f32 %v1534, %v1602
        %v1635 = vadd.f32 %v1535, %v1603
        %v1636 = vadd.f32 %v1536, %v1604
        %v1637 = vadd.f32 %v1537, %v1605
        %v1638 = vadd.f32 %v1538, %v1606
        %v1639 = vadd.f32 %v1539, %v1607
        %v1640 = vadd.f32 %v1540, %v1608
        %v1641 = vadd.f32 %v1541, %v1609
        %v1642 = vadd.f32 %v1542, %v1610
        %v1643 = vadd.f32 %v1543, %v1611
        %v1644 = vadd.f32 %v1544, %v1612
        %v1645 = vadd.f32 %v1545, %v1613
        %v1646 = vadd.f32 %v1546, %v1614
        %v1647 = vadd.f32 %v1547, %v1615
        %v1648 = vadd.f32 %v1548, %v1616
        %v1649 = vadd.f32 %v1549, %v1617
        %v1650 = vadd.f32 %v1550, %v1618
        %v1651 = vadd.f32 %v1551, %v1619
        %v1652 = vadd.f32 %v1552, %v1620
        %v1653 = vadd.f32 %v1553, %v1621
        %v1654 = vadd.f32 %v1554, %v1622
        %v1655 = vadd.f32 %v1555, %v1623
        %v1656 = vadd.f32 %v1556, %v1624
        %v1657 = vadd.f32 %v1557, %v1625
        %v1658 = vadd.f32 %v1558, %v1626
        %v1659 = vadd.f32 %v1559, %v1627
        %v1660 = vadd.f32 %v1560, %v1628
        %v1661 = vadd.f32 %v1561, %v1629
        %v1662 = vadd.f32 %v1562, %v1630
        %v1663 = vadd.f32 %v1563, %v1631
        %v1664 = vld [vmem:[%s4] sm:$0x1]
        %v1666 = vlaneseq
        %v1667 = vshrl.u32 %v1666, 7
        %v1668 = vsub.s32 0, %v1667
        %v1669 = vrot.slane %v1664, %v1668
        %v1671 = vadd.f32 %v1632, %v1669
        %v1672 = vadd.f32 %v1633, %v1669
        %v1673 = vadd.f32 %v1634, %v1669
        %v1674 = vadd.f32 %v1635, %v1669
        %v1675 = vadd.f32 %v1636, %v1669
        %v1676 = vadd.f32 %v1637, %v1669
        %v1677 = vadd.f32 %v1638, %v1669
        %v1678 = vadd.f32 %v1639, %v1669
        %v1679 = vadd.f32 %v1640, %v1669
        %v1680 = vadd.f32 %v1641, %v1669
        %v1681 = vadd.f32 %v1642, %v1669
        %v1682 = vadd.f32 %v1643, %v1669
        %v1683 = vadd.f32 %v1644, %v1669
        %v1684 = vadd.f32 %v1645, %v1669
        %v1685 = vadd.f32 %v1646, %v1669
        %v1686 = vadd.f32 %v1647, %v1669
        %v1687 = vadd.f32 %v1648, %v1669
        %v1688 = vadd.f32 %v1649, %v1669
        %v1689 = vadd.f32 %v1650, %v1669
        %v1690 = vadd.f32 %v1651, %v1669
        %v1691 = vadd.f32 %v1652, %v1669
        %v1692 = vadd.f32 %v1653, %v1669
        %v1693 = vadd.f32 %v1654, %v1669
        %v1694 = vadd.f32 %v1655, %v1669
        %v1695 = vadd.f32 %v1656, %v1669
        %v1696 = vadd.f32 %v1657, %v1669
        %v1697 = vadd.f32 %v1658, %v1669
        %v1698 = vadd.f32 %v1659, %v1669
        %v1699 = vadd.f32 %v1660, %v1669
        %v1700 = vadd.f32 %v1661, %v1669
        %v1701 = vadd.f32 %v1662, %v1669
        %v1702 = vadd.f32 %v1663, %v1669
        %v1703 = vmax.f32 %v1671, 0.0
        %v1704 = vmax.f32 %v1672, 0.0
        %v1705 = vmax.f32 %v1673, 0.0
        %v1706 = vmax.f32 %v1674, 0.0
        %v1707 = vmax.f32 %v1675, 0.0
        %v1708 = vmax.f32 %v1676, 0.0
        %v1709 = vmax.f32 %v1677, 0.0
        %v1710 = vmax.f32 %v1678, 0.0
        %v1711 = vmax.f32 %v1679, 0.0
        %v1712 = vmax.f32 %v1680, 0.0
        %v1713 = vmax.f32 %v1681, 0.0
        %v1714 = vmax.f32 %v1682, 0.0
        %v1715 = vmax.f32 %v1683, 0.0
        %v1716 = vmax.f32 %v1684, 0.0
        %v1717 = vmax.f32 %v1685, 0.0
        %v1718 = vmax.f32 %v1686, 0.0
        %v1719 = vmax.f32 %v1687, 0.0
        %v1720 = vmax.f32 %v1688, 0.0
        %v1721 = vmax.f32 %v1689, 0.0
        %v1722 = vmax.f32 %v1690, 0.0
        %v1723 = vmax.f32 %v1691, 0.0
        %v1724 = vmax.f32 %v1692, 0.0
        %v1725 = vmax.f32 %v1693, 0.0
        %v1726 = vmax.f32 %v1694, 0.0
        %v1727 = vmax.f32 %v1695, 0.0
        %v1728 = vmax.f32 %v1696, 0.0
        %v1729 = vmax.f32 %v1697, 0.0
        %v1730 = vmax.f32 %v1698, 0.0
        %v1731 = vmax.f32 %v1699, 0.0
        %v1732 = vmax.f32 %v1700, 0.0
        %v1733 = vmax.f32 %v1701, 0.0
        %v1734 = vmax.f32 %v1702, 0.0
        %v1735 = vmin.f32 %v1703, 6.0
        %v1736 = vmin.f32 %v1704, 6.0
        %v1737 = vmin.f32 %v1705, 6.0
        %v1738 = vmin.f32 %v1706, 6.0
        %v1739 = vmin.f32 %v1707, 6.0
        %v1740 = vmin.f32 %v1708, 6.0
        %v1741 = vmin.f32 %v1709, 6.0
        %v1742 = vmin.f32 %v1710, 6.0
        %v1743 = vmin.f32 %v1711, 6.0
        %v1744 = vmin.f32 %v1712, 6.0
        %v1745 = vmin.f32 %v1713, 6.0
        %v1746 = vmin.f32 %v1714, 6.0
        %v1747 = vmin.f32 %v1715, 6.0
        %v1748 = vmin.f32 %v1716, 6.0
        %v1749 = vmin.f32 %v1717, 6.0
        %v1750 = vmin.f32 %v1718, 6.0
        %v1751 = vmin.f32 %v1719, 6.0
        %v1752 = vmin.f32 %v1720, 6.0
        %v1753 = vmin.f32 %v1721, 6.0
        %v1754 = vmin.f32 %v1722, 6.0
        %v1755 = vmin.f32 %v1723, 6.0
        %v1756 = vmin.f32 %v1724, 6.0
        %v1757 = vmin.f32 %v1725, 6.0
        %v1758 = vmin.f32 %v1726, 6.0
        %v1759 = vmin.f32 %v1727, 6.0
        %v1760 = vmin.f32 %v1728, 6.0
        %v1761 = vmin.f32 %v1729, 6.0
        %v1762 = vmin.f32 %v1730, 6.0
        %v1763 = vmin.f32 %v1731, 6.0
        %v1764 = vmin.f32 %v1732, 6.0
        %v1765 = vmin.f32 %v1733, 6.0
        %v1766 = vmin.f32 %v1734, 6.0
        %v1767 = vpack.c.bf16 %v1736, %v1735
        %v1768 = vpack.c.bf16 %v1738, %v1737
        %v1769 = vpack.c.bf16 %v1740, %v1739
        %v1770 = vpack.c.bf16 %v1742, %v1741
        %v1771 = vpack.c.bf16 %v1744, %v1743
        %v1772 = vpack.c.bf16 %v1746, %v1745
        %v1773 = vpack.c.bf16 %v1748, %v1747
        %v1774 = vpack.c.bf16 %v1750, %v1749
        %v1775 = vpack.c.bf16 %v1752, %v1751
        %v1776 = vpack.c.bf16 %v1754, %v1753
        %v1777 = vpack.c.bf16 %v1756, %v1755
        %v1778 = vpack.c.bf16 %v1758, %v1757
        %v1779 = vpack.c.bf16 %v1760, %v1759
        %v1780 = vpack.c.bf16 %v1762, %v1761
        %v1781 = vpack.c.bf16 %v1764, %v1763
        %v1782 = vpack.c.bf16 %v1766, %v1765
        %v1783 = vld [vmem:[#allocation9] sm:$0xf]
        %v1784 = vld [vmem:[#allocation9 + $0x4] sm:$0xf]
        %v1785 = vld [vmem:[#allocation9 + $0x8] sm:$0xf]
        %v1786 = vld [vmem:[#allocation9 + $0xc] sm:$0xf]
        %v1787 = vld [vmem:[#allocation9 + $0x10] sm:$0xf]
        %v1788 = vld [vmem:[#allocation9 + $0x14] sm:$0xf]
        %v1789 = vld [vmem:[#allocation9 + $0x18] sm:$0xf]
        %v1790 = vld [vmem:[#allocation9 + $0x1c] sm:$0xf]
        %v1791 = vld [vmem:[#allocation9 + $0x20] sm:$0xf]
        %v1792 = vld [vmem:[#allocation9 + $0x24] sm:$0xf]
        %v1793 = vld [vmem:[#allocation9 + $0x28] sm:$0xf]
        %v1794 = vld [vmem:[#allocation9 + $0x2c] sm:$0xf]
        %v1795 = vld [vmem:[#allocation9 + $0x30] sm:$0xf]
        %v1796 = vld [vmem:[#allocation9 + $0x34] sm:$0xf]
        %v1797 = vld [vmem:[#allocation9 + $0x38] sm:$0xf]
        %v1798 = vld [vmem:[#allocation9 + $0x3c] sm:$0xf]
        %v1799 = vld [vmem:[%s6] sm:$0x1]
        %v1801 = vlaneseq
        %v1802 = vshrl.u32 %v1801, 7
        %v1803 = vsub.s32 0, %v1802
        %v1804 = vrot.slane %v1799, %v1803
        %v1822 = vunpack.c.l.b16 %v1783
        %v1823 = vunpack.c.l.b16 %v1784
        %v1824 = vunpack.c.l.b16 %v1785
        %v1825 = vunpack.c.l.b16 %v1786
        %v1826 = vunpack.c.l.b16 %v1787
        %v1827 = vunpack.c.l.b16 %v1788
        %v1828 = vunpack.c.l.b16 %v1789
        %v1829 = vunpack.c.l.b16 %v1790
        %v1830 = vunpack.c.l.b16 %v1791
        %v1831 = vunpack.c.l.b16 %v1792
        %v1832 = vunpack.c.l.b16 %v1793
        %v1833 = vunpack.c.l.b16 %v1794
        %v1834 = vunpack.c.l.b16 %v1795
        %v1835 = vunpack.c.l.b16 %v1796
        %v1836 = vunpack.c.l.b16 %v1797
        %v1837 = vunpack.c.l.b16 %v1798
        %v1838 = vpack.c.b16 %v1823, %v1822
        %v1839 = vpack.c.b16 %v1825, %v1824
        %v1840 = vpack.c.b16 %v1827, %v1826
        %v1841 = vpack.c.b16 %v1829, %v1828
        %v1842 = vpack.c.b16 %v1831, %v1830
        %v1843 = vpack.c.b16 %v1833, %v1832
        %v1844 = vpack.c.b16 %v1835, %v1834
        %v1845 = vpack.c.b16 %v1837, %v1836
        %1854 = vmatprep.subr.bf16.mxu0 0
        %1855 = vmatpush1.bf16.msra.mxu0 %v1838
        %1856 = vmatprep.subr.bf16.mxu0 0
        %1857 = vmatpush1.bf16.msra.mxu0 %v1839
        %1858 = vmatprep.subr.bf16.mxu0 0
        %1859 = vmatpush1.bf16.msra.mxu0 %v1840
        %1860 = vmatprep.subr.bf16.mxu0 0
        %1861 = vmatpush1.bf16.msra.mxu0 %v1841
        %1862 = vmatprep.subr.bf16.mxu0 0
        %1863 = vmatpush1.bf16.msra.mxu0 %v1842
        %1864 = vmatprep.subr.bf16.mxu0 0
        %1865 = vmatpush1.bf16.msra.mxu0 %v1843
        %1866 = vmatprep.subr.bf16.mxu0 0
        %1867 = vmatpush1.bf16.msra.mxu0 %v1844
        %1868 = vmatprep.subr.bf16.mxu0 0
        %1869 = vmatpush1.bf16.msra.mxu0 %v1845
        %1870 = vmatprep.subr.bf16.mxu0 0
        %1871 = vmatpush1.bf16.msra.mxu0 0
        %1872 = vmatprep.subr.bf16.mxu0 0
        %1873 = vmatpush1.bf16.msra.mxu0 0
        %1874 = vmatprep.subr.bf16.mxu0 0
        %1875 = vmatpush1.bf16.msra.mxu0 0
        %1876 = vmatprep.subr.bf16.mxu0 0
        %1877 = vmatpush1.bf16.msra.mxu0 0
        %1878 = vmatprep.subr.bf16.mxu0 0
        %1879 = vmatpush1.bf16.msra.mxu0 0
        %1880 = vmatprep.subr.bf16.mxu0 0
        %1881 = vmatpush1.bf16.msra.mxu0 0
        %1882 = vmatprep.subr.bf16.mxu0 0
        %1883 = vmatpush1.bf16.msra.mxu0 0
        %1884 = vmatprep.subr.bf16.mxu0 0
        %1885 = vmatpush1.bf16.msra.mxu0 0
        %1886 = vmatprep.mubr.bf16.mxu0 0
        %1887 = vmatmul.mubr.bf16.gmra.mrb[0].mxu0 %v1767
        %v1888 = vpop.f32.mrb[0].mxu0
        %v1889 = vadd.f32 %v1804, %v1888
        %v1890 = vpop.f32.mrb[0].mxu0
        %v1891 = vpop.f32.mrb[0].mxu0
        %v1892 = vadd.f32 %v1804, %v1891
        %v1893 = vpop.f32.mrb[0].mxu0
        %1894 = vmatprep.mubr.bf16.mxu0 0
        %1895 = vmatmul.mubr.bf16.gmra.mrb[0].mxu0 %v1768
        %v1896 = vpop.f32.mrb[0].mxu0
        %v1897 = vadd.f32 %v1804, %v1896
        %v1898 = vpop.f32.mrb[0].mxu0
        %v1899 = vpop.f32.mrb[0].mxu0
        %v1900 = vadd.f32 %v1804, %v1899
        %v1901 = vpop.f32.mrb[0].mxu0
        %1902 = vmatprep.mubr.bf16.mxu0 0
        %1903 = vmatmul.mubr.bf16.gmra.mrb[0].mxu0 %v1769
        %v1904 = vpop.f32.mrb[0].mxu0
        %v1905 = vadd.f32 %v1804, %v1904
        %v1906 = vpop.f32.mrb[0].mxu0
        %v1907 = vpop.f32.mrb[0].mxu0
        %v1908 = vadd.f32 %v1804, %v1907
        %v1909 = vpop.f32.mrb[0].mxu0
        %1910 = vmatprep.mubr.bf16.mxu0 0
        %1911 = vmatmul.mubr.bf16.gmra.mrb[0].mxu0 %v1770
        %v1912 = vpop.f32.mrb[0].mxu0
        %v1913 = vadd.f32 %v1804, %v1912
        %v1914 = vpop.f32.mrb[0].mxu0
        %v1915 = vpop.f32.mrb[0].mxu0
        %v1916 = vadd.f32 %v1804, %v1915
        %v1917 = vpop.f32.mrb[0].mxu0
        %1918 = vmatprep.mubr.bf16.mxu0 0
        %1919 = vmatmul.mubr.bf16.gmra.mrb[0].mxu0 %v1771
        %v1920 = vpop.f32.mrb[0].mxu0
        %v1921 = vadd.f32 %v1804, %v1920
        %v1922 = vpop.f32.mrb[0].mxu0
        %v1923 = vpop.f32.mrb[0].mxu0
        %v1924 = vadd.f32 %v1804, %v1923
        %v1925 = vpop.f32.mrb[0].mxu0
        %1926 = vmatprep.mubr.bf16.mxu0 0
        %1927 = vmatmul.mubr.bf16.gmra.mrb[0].mxu0 %v1772
        %v1928 = vpop.f32.mrb[0].mxu0
        %v1929 = vadd.f32 %v1804, %v1928
        %v1930 = vpop.f32.mrb[0].mxu0
        %v1931 = vpop.f32.mrb[0].mxu0
        %v1932 = vadd.f32 %v1804, %v1931
        %v1933 = vpop.f32.mrb[0].mxu0
        %1934 = vmatprep.mubr.bf16.mxu0 0
        %1935 = vmatmul.mubr.bf16.gmra.mrb[0].mxu0 %v1773
        %v1936 = vpop.f32.mrb[0].mxu0
        %v1937 = vadd.f32 %v1804, %v1936
        %v1938 = vpop.f32.mrb[0].mxu0
        %v1939 = vpop.f32.mrb[0].mxu0
        %v1940 = vadd.f32 %v1804, %v1939
        %v1941 = vpop.f32.mrb[0].mxu0
        %1942 = vmatprep.mubr.bf16.mxu0 0
        %1943 = vmatmul.mubr.bf16.gmra.mrb[0].mxu0 %v1774
        %v1944 = vpop.f32.mrb[0].mxu0
        %v1945 = vadd.f32 %v1804, %v1944
        %v1946 = vpop.f32.mrb[0].mxu0
        %v1947 = vpop.f32.mrb[0].mxu0
        %v1948 = vadd.f32 %v1804, %v1947
        %v1949 = vpop.f32.mrb[0].mxu0
        %1950 = vmatprep.mubr.bf16.mxu0 0
        %1951 = vmatmul.mubr.bf16.gmra.mrb[0].mxu0 %v1775
        %v1952 = vpop.f32.mrb[0].mxu0
        %v1953 = vadd.f32 %v1804, %v1952
        %v1954 = vpop.f32.mrb[0].mxu0
        %v1955 = vpop.f32.mrb[0].mxu0
        %v1956 = vadd.f32 %v1804, %v1955
        %v1957 = vpop.f32.mrb[0].mxu0
        %1958 = vmatprep.mubr.bf16.mxu0 0
        %1959 = vmatmul.mubr.bf16.gmra.mrb[0].mxu0 %v1776
        %v1960 = vpop.f32.mrb[0].mxu0
        %v1961 = vadd.f32 %v1804, %v1960
        %v1962 = vpop.f32.mrb[0].mxu0
        %v1963 = vpop.f32.mrb[0].mxu0
        %v1964 = vadd.f32 %v1804, %v1963
        %v1965 = vpop.f32.mrb[0].mxu0
        %1966 = vmatprep.mubr.bf16.mxu0 0
        %1967 = vmatmul.mubr.bf16.gmra.mrb[0].mxu0 %v1777
        %v1968 = vpop.f32.mrb[0].mxu0
        %v1969 = vadd.f32 %v1804, %v1968
        %v1970 = vpop.f32.mrb[0].mxu0
        %v1971 = vpop.f32.mrb[0].mxu0
        %v1972 = vadd.f32 %v1804, %v1971
        %v1973 = vpop.f32.mrb[0].mxu0
        %1974 = vmatprep.mubr.bf16.mxu0 0
        %1975 = vmatmul.mubr.bf16.gmra.mrb[0].mxu0 %v1778
        %v1976 = vpop.f32.mrb[0].mxu0
        %v1977 = vadd.f32 %v1804, %v1976
        %v1978 = vpop.f32.mrb[0].mxu0
        %v1979 = vpop.f32.mrb[0].mxu0
        %v1980 = vadd.f32 %v1804, %v1979
        %v1981 = vpop.f32.mrb[0].mxu0
        %1982 = vmatprep.mubr.bf16.mxu0 0
        %1983 = vmatmul.mubr.bf16.gmra.mrb[0].mxu0 %v1779
        %v1984 = vpop.f32.mrb[0].mxu0
        %v1985 = vadd.f32 %v1804, %v1984
        %v1986 = vpop.f32.mrb[0].mxu0
        %v1987 = vpop.f32.mrb[0].mxu0
        %v1988 = vadd.f32 %v1804, %v1987
        %v1989 = vpop.f32.mrb[0].mxu0
        %1990 = vmatprep.mubr.bf16.mxu0 0
        %1991 = vmatmul.mubr.bf16.gmra.mrb[0].mxu0 %v1780
        %v1992 = vpop.f32.mrb[0].mxu0
        %v1993 = vadd.f32 %v1804, %v1992
        %v1994 = vpop.f32.mrb[0].mxu0
        %v1995 = vpop.f32.mrb[0].mxu0
        %v1996 = vadd.f32 %v1804, %v1995
        %v1997 = vpop.f32.mrb[0].mxu0
        %1998 = vmatprep.mubr.bf16.mxu0 0
        %1999 = vmatmul.mubr.bf16.gmra.mrb[0].mxu0 %v1781
        %v2000 = vpop.f32.mrb[0].mxu0
        %v2001 = vadd.f32 %v1804, %v2000
        %v2002 = vpop.f32.mrb[0].mxu0
        %v2003 = vpop.f32.mrb[0].mxu0
        %v2004 = vadd.f32 %v1804, %v2003
        %v2005 = vpop.f32.mrb[0].mxu0
        %2006 = vmatprep.mubr.bf16.mxu0 0
        %2007 = vmatmul.mubr.bf16.gmra.mrb[0].mxu0 %v1782
        %v2008 = vpop.f32.mrb[0].mxu0
        %v2009 = vadd.f32 %v1804, %v2008
        %v2010 = vpop.f32.mrb[0].mxu0
        %v2011 = vpop.f32.mrb[0].mxu0
        %v2012 = vadd.f32 %v1804, %v2011
        %v2013 = vpop.f32.mrb[0].mxu0
        %2014 = vdwg.mxu0
        %v2015 = vld [vmem:[%s298] sm:$0xff]
        %v2016 = vld [vmem:[%s298 + $0x8] sm:$0xff]
        %v2017 = vld [vmem:[%s298 + $0x10] sm:$0xff]
        %v2018 = vld [vmem:[%s298 + $0x18] sm:$0xff]
        %v2019 = vld [vmem:[%s298 + $0x20] sm:$0xff]
        %v2020 = vld [vmem:[%s298 + $0x28] sm:$0xff]
        %v2021 = vld [vmem:[%s298 + $0x30] sm:$0xff]
        %v2022 = vld [vmem:[%s298 + $0x38] sm:$0xff]
        %v2023 = vld [vmem:[%s298 + $0x40] sm:$0xff]
        %v2024 = vld [vmem:[%s298 + $0x48] sm:$0xff]
        %v2025 = vld [vmem:[%s298 + $0x50] sm:$0xff]
        %v2026 = vld [vmem:[%s298 + $0x58] sm:$0xff]
        %v2027 = vld [vmem:[%s298 + $0x60] sm:$0xff]
        %v2028 = vld [vmem:[%s298 + $0x68] sm:$0xff]
        %v2029 = vld [vmem:[%s298 + $0x70] sm:$0xff]
        %v2030 = vld [vmem:[%s298 + $0x78] sm:$0xff]
        %v2031 = vld [vmem:[%s298 + $0x80] sm:$0xff]
        %v2032 = vld [vmem:[%s298 + $0x88] sm:$0xff]
        %v2033 = vld [vmem:[%s298 + $0x90] sm:$0xff]
        %v2034 = vld [vmem:[%s298 + $0x98] sm:$0xff]
        %v2035 = vld [vmem:[%s298 + $0xa0] sm:$0xff]
        %v2036 = vld [vmem:[%s298 + $0xa8] sm:$0xff]
        %v2037 = vld [vmem:[%s298 + $0xb0] sm:$0xff]
        %v2038 = vld [vmem:[%s298 + $0xb8] sm:$0xff]
        %v2039 = vld [vmem:[%s298 + $0xc0] sm:$0xff]
        %v2040 = vld [vmem:[%s298 + $0xc8] sm:$0xff]
        %v2041 = vld [vmem:[%s298 + $0xd0] sm:$0xff]
        %v2042 = vld [vmem:[%s298 + $0xd8] sm:$0xff]
        %v2043 = vld [vmem:[%s298 + $0xe0] sm:$0xff]
        %v2044 = vld [vmem:[%s298 + $0xe8] sm:$0xff]
        %v2045 = vld [vmem:[%s298 + $0xf0] sm:$0xff]
        %v2046 = vld [vmem:[%s298 + $0xf8] sm:$0xff]
        %v2047 = vadd.f32 %v1889, %v2015
        %v2048 = vadd.f32 %v1892, %v2016
        %v2049 = vadd.f32 %v1897, %v2017
        %v2050 = vadd.f32 %v1900, %v2018
        %v2051 = vadd.f32 %v1905, %v2019
        %v2052 = vadd.f32 %v1908, %v2020
        %v2053 = vadd.f32 %v1913, %v2021
        %v2054 = vadd.f32 %v1916, %v2022
        %v2055 = vadd.f32 %v1921, %v2023
        %v2056 = vadd.f32 %v1924, %v2024
        %v2057 = vadd.f32 %v1929, %v2025
        %v2058 = vadd.f32 %v1932, %v2026
        %v2059 = vadd.f32 %v1937, %v2027
        %v2060 = vadd.f32 %v1940, %v2028
        %v2061 = vadd.f32 %v1945, %v2029
        %v2062 = vadd.f32 %v1948, %v2030
        %v2063 = vadd.f32 %v1953, %v2031
        %v2064 = vadd.f32 %v1956, %v2032
        %v2065 = vadd.f32 %v1961, %v2033
        %v2066 = vadd.f32 %v1964, %v2034
        %v2067 = vadd.f32 %v1969, %v2035
        %v2068 = vadd.f32 %v1972, %v2036
        %v2069 = vadd.f32 %v1977, %v2037
        %v2070 = vadd.f32 %v1980, %v2038
        %v2071 = vadd.f32 %v1985, %v2039
        %v2072 = vadd.f32 %v1988, %v2040
        %v2073 = vadd.f32 %v1993, %v2041
        %v2074 = vadd.f32 %v1996, %v2042
        %v2075 = vadd.f32 %v2001, %v2043
        %v2076 = vadd.f32 %v2004, %v2044
        %v2077 = vadd.f32 %v2009, %v2045
        %v2078 = vadd.f32 %v2012, %v2046
        %2079 = vst [vmem:[%s340] sm:$0xff] %v2047
        %2080 = vst [vmem:[%s340 + $0x8] sm:$0xff] %v2048
        %2081 = vst [vmem:[%s340 + $0x10] sm:$0xff] %v2049
        %2082 = vst [vmem:[%s340 + $0x18] sm:$0xff] %v2050
        %2083 = vst [vmem:[%s340 + $0x20] sm:$0xff] %v2051
        %2084 = vst [vmem:[%s340 + $0x28] sm:$0xff] %v2052
        %2085 = vst [vmem:[%s340 + $0x30] sm:$0xff] %v2053
        %2086 = vst [vmem:[%s340 + $0x38] sm:$0xff] %v2054
        %2087 = vst [vmem:[%s340 + $0x40] sm:$0xff] %v2055
        %2088 = vst [vmem:[%s340 + $0x48] sm:$0xff] %v2056
        %2089 = vst [vmem:[%s340 + $0x50] sm:$0xff] %v2057
        %2090 = vst [vmem:[%s340 + $0x58] sm:$0xff] %v2058
        %2091 = vst [vmem:[%s340 + $0x60] sm:$0xff] %v2059
        %2092 = vst [vmem:[%s340 + $0x68] sm:$0xff] %v2060
        %2093 = vst [vmem:[%s340 + $0x70] sm:$0xff] %v2061
        %2094 = vst [vmem:[%s340 + $0x78] sm:$0xff] %v2062
        %2095 = vst [vmem:[%s340 + $0x80] sm:$0xff] %v2063
        %2096 = vst [vmem:[%s340 + $0x88] sm:$0xff] %v2064
        %2097 = vst [vmem:[%s340 + $0x90] sm:$0xff] %v2065
        %2098 = vst [vmem:[%s340 + $0x98] sm:$0xff] %v2066
        %2099 = vst [vmem:[%s340 + $0xa0] sm:$0xff] %v2067
        %2100 = vst [vmem:[%s340 + $0xa8] sm:$0xff] %v2068
        %2101 = vst [vmem:[%s340 + $0xb0] sm:$0xff] %v2069
        %2102 = vst [vmem:[%s340 + $0xb8] sm:$0xff] %v2070
        %2103 = vst [vmem:[%s340 + $0xc0] sm:$0xff] %v2071
        %2104 = vst [vmem:[%s340 + $0xc8] sm:$0xff] %v2072
        %2105 = vst [vmem:[%s340 + $0xd0] sm:$0xff] %v2073
        %2106 = vst [vmem:[%s340 + $0xd8] sm:$0xff] %v2074
        %2107 = vst [vmem:[%s340 + $0xe0] sm:$0xff] %v2075
        %2108 = vst [vmem:[%s340 + $0xe8] sm:$0xff] %v2076
        %2109 = vst [vmem:[%s340 + $0xf0] sm:$0xff] %v2077
        %2110 = vst [vmem:[%s340 + $0xf8] sm:$0xff] %v2078
        %s2111 = sand.u32 %s186, 1
        %s2112 = scalar_lea.sflag [#allocation5], %s2111
        %s2113 = sand.u32 %s186, 1
        %s2114 = smul.addr %s2113, 256
        %s2115 = scalar_lea.vmem [#allocation11], %s2114
        // Predicated region
        $region65: #{tpu_custom_call.1} parent=47 // pred_check
          %p2116 = pneg %p196
        $region66: #{tpu_custom_call.1} parent=47 // pred_check_branch
          %2118 = sbr.rel (%p2116) target = $region68
        $region67: #{tpu_custom_call.1} parent=47 // pred_region
          %s2120 = ssub.s32 4096, 4096
          %2121 = vsyncadd %s2112, %s2120
          %s2122 = smul.addr %s26, 32
          %s2123 = smul.addr %s2122, 128
          %s2124 = scalar_lea.hbm %s7, %s2123
          %s2125 = sshll.u32 %s2115, 4
          %s2126 = int_to_ptr.vmem [resolvable:$true] %s2125
          %2131 = dma.vmem_to_hbm [thread:$0]  %s2126, 4096, %s2124, %s2112, 128, 128, 8
        $region68: #{tpu_custom_call.1} parent=47 // pred_fallthru
          _
      $region48: #{tpu_custom_call.1} parent=5 // pred_fallthru
        _
      %p2132 = scmp.le.s32.totalorder 2, %s21
      // Predicated region
      $region69: #{tpu_custom_call.1} parent=5 // pred_check
        %p2133 = pneg %p2132
      $region70: #{tpu_custom_call.1} parent=5 // pred_check_branch
        %2135 = sbr.rel (%p2133) target = $region72
      $region71: #{tpu_custom_call.1} parent=5 // pred_region
        %s2136 = ssub.s32 %s21, 2
        // Predicated region
        $region73: #{tpu_custom_call.1} parent=71 // pred_check
          %p2137 = pneg %p202
        $region74: #{tpu_custom_call.1} parent=71 // pred_check_branch
          %2139 = sbr.rel (%p2137) target = $region76
        $region75: #{tpu_custom_call.1} parent=71 // pred_region
          %s2140 = sand.u32 %s187, 1
          %s2141 = scalar_lea.sflag [#allocation5], %s2140
          %s2142 = sand.u32 %s187, 1
          %s2143 = smul.addr %s2142, 256
          %s2144 = scalar_lea.vmem [#allocation11], %s2143
          %2145 = dma.done %s2141, 4096
        $region76: #{tpu_custom_call.1} parent=71 // pred_fallthru
          _
      $region72: #{tpu_custom_call.1} parent=5 // pred_fallthru
        _
    $region6: #{tpu_custom_call.1} parent=1 // loop_footer
      %s25 = sadd.s32 1, %s21
    $region7: #{tpu_custom_call.1} parent=1 // loop_footer_branch
      %20 = sbr.rel target = $region3
    $region8: #{tpu_custom_call.1} parent=1 // loop_exit
      _
    %2146 = vsyncpa [#allocation4], 1
    %s2147 = scalar_lea.sflag [#allocation4], 1
    %2148 = vsyncpa %s2147, 1
    %2149 = vsyncpa [#allocation7], 1
    %2150 = vsyncpa [#allocation10], 1
    %2151 = vsyncpa [#allocation5], 1
    %s2152 = scalar_lea.sflag [#allocation5], 1
    %2153 = vsyncpa %s2152, 1

</llo_original>
